<compile_context>
chip_gen: v6e
topology: v6e:2x2x1
jax: 0.10.0
libtpu: 0.0.40
codegen_flags: <defaults>
</compile_context>

<pallas_src>
import math
from functools import partial

import jax
import jax.numpy as jnp
from jax.experimental import pallas as pl
from jax.experimental.pallas import tpu as pltpu


# --------------------------- generation-aware budgets ------------------------

_BUDGETS = None


def _tpu_budgets():
    """Tile caps and scoped-VMEM limit chosen from the chip's VMEM capacity."""
    global _BUDGETS
    if _BUDGETS is None:
        vmem_cap = 128 * 1024 * 1024
        try:
            info = pltpu.get_tpu_info()
            vmem_cap = int(getattr(info, "vmem_capacity_bytes", vmem_cap))
        except Exception:
            pass
        if vmem_cap <= 64 * 1024 * 1024:
            # v7x-class: 64 MiB physical per TensorCore -> leave headroom.
            _BUDGETS = dict(vmem_limit=40 * 1024 * 1024,
                            tm_cap=256, tn_cap=2048, tc_cap=256)
        else:
            # v5e / v6e: 128 MiB physical VMEM -> bigger tiles, fewer grid steps.
            _BUDGETS = dict(vmem_limit=64 * 1024 * 1024,
                            tm_cap=512, tn_cap=4096, tc_cap=512)
    return _BUDGETS


def _pick_tile(dim, cap, align):
    """Largest tile <= cap that divides `dim` (preferring multiples of `align`).
    Never returns more than max(dim<=cap ? dim : cap), so it cannot silently
    produce an array-sized block that blows the VMEM budget."""
    if dim <= cap:
        return dim
    t = (min(cap, dim) // align) * align
    while t >= align:
        if dim % t == 0:
            return t
        t -= align
    for t in range(min(cap, dim), 0, -1):   # any divisor <= cap
        if dim % t == 0:
            return t
    return dim  # unreachable (1 always divides)


# --------------------------- matmul + fused bias -----------------------------
# Weight block (K, tn) has a constant index_map along the M grid axis, so it is
# DMA'd once and stays resident in VMEM; activations stream over M tiles.

def _matmul_bias_kernel(x_ref, w_ref, b_ref, o_ref):
    a = x_ref[...]
    if a.dtype != jnp.bfloat16:           # fc1 input arrives fp32; weights/hidden are bf16
        a = a.astype(jnp.bfloat16)
    acc = jnp.dot(a, w_ref[...], preferred_element_type=jnp.float32)   # fp32 accumulate
    o_ref[...] = (acc + b_ref[...].astype(jnp.float32)).astype(o_ref.dtype)


def matmul_bias(x2d, w, b, *, out_dtype=None):
    M, K = x2d.shape
    K2, N = w.shape
    assert K == K2 and b.shape == (N,)
    bud = _tpu_budgets()
    out_dtype = out_dtype or x2d.dtype

    tm = _pick_tile(M, bud['tm_cap'], 128)
    # Keep the resident weight block well under the VMEM budget.
    w_budget = bud['vmem_limit'] // 4
    tn_cap = min(bud['tn_cap'],
                 max(128, (w_budget // (w.dtype.itemsize * K)) // 128 * 128))
    tn = _pick_tile(N, tn_cap, 128)

    grid = (M // tm, N // tn)
    return pl.pallas_call(
        _matmul_bias_kernel,
        out_shape=jax.ShapeDtypeStruct((M, N), out_dtype),
        grid=grid,
        in_specs=[
            pl.BlockSpec((tm, K), lambda i, j: (i, 0)),
            pl.BlockSpec((K, tn), lambda i, j: (0, j)),   # resident weight block
            pl.BlockSpec((1, tn), lambda i, j: (0, j)),
        ],
        out_specs=pl.BlockSpec((tm, tn), lambda i, j: (i, j)),
        compiler_params=pltpu.CompilerParams(
            dimension_semantics=("parallel", "parallel"),
            vmem_limit_bytes=bud['vmem_limit'],
        ),
    )(x2d, w, b.reshape(1, N))


# --------------------- depthwise 3x3 conv + bias + GELU ----------------------
# Zero halo is built in a VMEM scratch slab inside the kernel (no HBM pad copy).

def _dwconv_gelu_kernel(x_ref, w_ref, b_ref, o_ref, xp_ref, *, H, W):
    # Padded slab: zero everything, then write the interior (halo stays zero).
    # The full zero-fill is a few extra VMEM stores per step -- negligible next
    # to the input DMA -- and is correct regardless of megacore grid splitting.
    xp_ref[...] = jnp.zeros_like(xp_ref)
    xp_ref[1:H + 1, 1:W + 1, :] = x_ref[0].astype(jnp.float32)

    w9 = w_ref[...].astype(jnp.float32)     # (9, Ct), tap-major
    bias = b_ref[...].astype(jnp.float32)   # (1, Ct)

    # Hoist the 3 W-direction (sublane) shifts out of the 9-tap loop; per-tap
    # H offsets are cheap leading-dim slices of the loaded slabs.
    shifted = [xp_ref[:, kx:kx + W, :] for kx in range(3)]

    acc = jnp.zeros((H, W, xp_ref.shape[-1]), jnp.float32)
    for ky in range(3):
        for kx in range(3):
            acc = acc + shifted[kx][ky:ky + H, :, :] * w9[ky * 3 + kx, :]

    y = acc + bias                                                    # conv bias
    y = 0.5 * y * (1.0 + jax.lax.erf(y * 0.7071067811865475))         # exact GELU
    o_ref[0] = y.astype(o_ref.dtype)


def dwconv_gelu(x_img, w9, b, *, out_dtype=jnp.bfloat16):
    """x_img: (B, H, W, C) NHWC; depthwise 3x3, stride 1, pad 1, groups=C,
    with conv bias and exact-erf GELU fused as the epilogue."""
    B, H, W, C = x_img.shape
    bud = _tpu_budgets()
    tc = _pick_tile(C, bud['tc_cap'], 128)
    return pl.pallas_call(
        partial(_dwconv_gelu_kernel, H=H, W=W),
        out_shape=jax.ShapeDtypeStruct((B, H, W, C), out_dtype),
        grid=(B, C // tc),
        in_specs=[
            pl.BlockSpec((1, H, W, tc), lambda b_, c: (b_, 0, 0, c)),
            pl.BlockSpec((9, tc), lambda b_, c: (0, c)),
            pl.BlockSpec((1, tc), lambda b_, c: (0, c)),
        ],
        out_specs=pl.BlockSpec((1, H, W, tc), lambda b_, c: (b_, 0, 0, c)),
        scratch_shapes=[pltpu.VMEM((H + 2, W + 2, tc), jnp.float32)],
        compiler_params=pltpu.CompilerParams(
            dimension_semantics=("parallel", "parallel"),
            vmem_limit_bytes=bud['vmem_limit'],
        ),
    )(x_img, w9, b.reshape(1, C))


# ------------------------------- Mlp forward ---------------------------------

def prepare_params(params):
    """One-time cast of the large matmul weights to bf16 in HBM (MXU operands);
    biases and the tiny depthwise weight stay fp32 for exact epilogue math."""
    p = dict(params)
    p['fc1_w'] = params['fc1_w'].astype(jnp.bfloat16)
    p['fc2_w'] = params['fc2_w'].astype(jnp.bfloat16)
    return p


def mlp_forward(x, H, W, params):
    """x: (B, N, C) tokens with N == H*W. Mirrors Mlp.forward; drop=0.0 -> identity.
    Hidden activation is kept bf16 between kernels; final output is x.dtype."""
    B, N, C = x.shape
    hidden = params['fc1_w'].shape[1]
    h = matmul_bias(x.reshape(B * N, C), params['fc1_w'], params['fc1_b'],
                    out_dtype=jnp.bfloat16)                                        # fc1
    h = dwconv_gelu(h.reshape(B, H, W, hidden), params['dw_w'], params['dw_b'],
                    out_dtype=jnp.bfloat16)                                        # dwconv + act
    y = matmul_bias(h.reshape(B * N, hidden), params['fc2_w'], params['fc2_b'],
                    out_dtype=x.dtype)                                             # fc2
    return y.reshape(B, N, C)


def mlp_reference(x, H, W, params):
    """Plain-JAX fp32 reference of the same forward math, for a sanity check."""
    B, N, C = x.shape
    h = x @ params['fc1_w'] + params['fc1_b']
    hid = h.shape[-1]
    img = h.reshape(B, H, W, hid)
    imgp = jnp.pad(img, ((0, 0), (1, 1), (1, 1), (0, 0)))
    acc = jnp.zeros_like(img)
    for ky in range(3):
        for kx in range(3):
            acc = acc + imgp[:, ky:ky + H, kx:kx + W, :] * params['dw_w'][ky * 3 + kx]
    h = acc + params['dw_b']
    h = 0.5 * h * (1.0 + jax.lax.erf(h * 0.7071067811865475))
    return h.reshape(B, N, hid) @ params['fc2_w'] + params['fc2_b']


# ------------------------------ parameter init -------------------------------

def init_mlp_params(key, in_features, hidden_features):
    k1, k2, k3 = jax.random.split(key, 3)
    # TODO(synk): trunc_normal_(std=0.02) approximated with plain normal (same std).
    return {
        'fc1_w': 0.02 * jax.random.normal(k1, (in_features, hidden_features), jnp.float32),
        'fc1_b': jnp.zeros((hidden_features,), jnp.float32),
        # PyTorch depthwise weight (C,1,3,3) stored tap-major as (9, C).
        # Conv2d init: normal(0, sqrt(2/fan_out)), fan_out = 3*3*C/groups = 9.
        'dw_w': math.sqrt(2.0 / 9.0) * jax.random.normal(k2, (9, hidden_features), jnp.float32),
        'dw_b': jnp.zeros((hidden_features,), jnp.float32),
        'fc2_w': 0.02 * jax.random.normal(k3, (hidden_features, in_features), jnp.float32),
        'fc2_b': jnp.zeros((in_features,), jnp.float32),
    }


# ------------------------------------ main ------------------------------------

if __name__ == "__main__":
    B, H, W = 2, 8, 8
    C, HIDDEN = 128, 256          # lane-dense channel dims (multiples of 128)
    N = H * W

    root = jax.random.PRNGKey(0)
    kp, kx = jax.random.split(root)
    params = init_mlp_params(kp, C, HIDDEN)
    run_params = prepare_params(params)     # bf16 matmul weights, cast once outside jit
    x = jax.random.normal(kx, (B, N, C), jnp.float32)

    fwd = jax.jit(lambda xx, pp: mlp_forward(xx, H, W, pp))
    y = fwd(x, run_params)
    jax.block_until_ready(y)
    assert y.shape == (B, N, C)

    # Loose numerical check vs the plain-JAX fp32 reference. bf16 MXU operands,
    # bf16 hidden-activation storage, fp32 accumulation/epilogues -> a few e-3
    # max abs error expected at these magnitudes.
    y_ref = mlp_reference(x, H, W, params)
    err = float(jnp.max(jnp.abs(y - y_ref)))
    assert err < 2e-2, f"mismatch vs reference: max abs err = {err}"

    print("KERNEL_OK")
</pallas_src>

<mosaic_0001>
module attributes {stable_mosaic.version = 11 : i64} {
  func.func @_matmul_bias_kernel(%arg0: i32, %arg1: i32, %arg2: memref<128x128xf32, #tpu.memory_space<vmem>>, %arg3: memref<128x256xbf16, #tpu.memory_space<vmem>>, %arg4: memref<1x256xf32, #tpu.memory_space<vmem>>, %arg5: memref<128x256xbf16, #tpu.memory_space<vmem>>) attributes {dimension_semantics = [#tpu.dimension_semantics<parallel>, #tpu.dimension_semantics<parallel>], iteration_bounds = array<i64: 1, 1>, scalar_prefetch = 0 : i64, scratch_operands = 0 : i64, tpu.core_type = #tpu.core_type<tc>, window_params = [{transform_indices = @transform_0, window_bounds = array<i64: 128, 128>}, {transform_indices = @transform_1, window_bounds = array<i64: 128, 256>}, {transform_indices = @transform_2, window_bounds = array<i64: 1, 256>}, {transform_indices = @transform_3, window_bounds = array<i64: 128, 256>}]} {
    %c0 = arith.constant 0 : index
    %c0_0 = arith.constant 0 : index
    %0 = vector.load %arg2[%c0, %c0_0] : memref<128x128xf32, #tpu.memory_space<vmem>>, vector<128x128xf32>
    %1 = arith.truncf %0 : vector<128x128xf32> to vector<128x128xbf16>
    %c0_1 = arith.constant 0 : index
    %c0_2 = arith.constant 0 : index
    %2 = vector.load %arg3[%c0_1, %c0_2] : memref<128x256xbf16, #tpu.memory_space<vmem>>, vector<128x256xbf16>
    %cst = arith.constant dense<0.000000e+00> : vector<128x256xf32>
    %3 = tpu.matmul %1, %2, %cst {dimension_numbers = #tpu.dot_dimension_numbers<[1], [0], [0], [1], [0, 0, 1, 1], [], []>} : vector<128x128xbf16>, vector<128x256xbf16>, vector<128x256xf32> -> vector<128x256xf32>
    %c0_3 = arith.constant 0 : index
    %c0_4 = arith.constant 0 : index
    %4 = vector.load %arg4[%c0_3, %c0_4] : memref<1x256xf32, #tpu.memory_space<vmem>>, vector<1x256xf32>
    %5 = vector.broadcast %4 : vector<1x256xf32> to vector<128x256xf32>
    %6 = arith.addf %3, %5 : vector<128x256xf32>
    %7 = arith.truncf %6 : vector<128x256xf32> to vector<128x256xbf16>
    %c0_5 = arith.constant 0 : index
    %c0_6 = arith.constant 0 : index
    %8 = vector.load %arg5[%c0_5, %c0_6] : memref<128x256xbf16, #tpu.memory_space<vmem>>, vector<128x256xbf16>
    tpu.vector_store %arg5[%c0_5, %c0_6], %7 {strides = array<i32>} : memref<128x256xbf16, #tpu.memory_space<vmem>>, vector<128x256xbf16>,
    return
  }
  func.func @transform_0(%arg0: i32, %arg1: i32) -> (i32, i32) {
    %c0_i32 = arith.constant 0 : i32
    %c0_i32_0 = arith.constant 0 : i32
    return %arg0, %c0_i32 : i32, i32
  }
  func.func @transform_1(%arg0: i32, %arg1: i32) -> (i32, i32) {
    %c0_i32 = arith.constant 0 : i32
    %c0_i32_0 = arith.constant 0 : i32
    return %c0_i32, %arg1 : i32, i32
  }
  func.func @transform_2(%arg0: i32, %arg1: i32) -> (i32, i32) {
    %c0_i32 = arith.constant 0 : i32
    %c0_i32_0 = arith.constant 0 : i32
    return %c0_i32, %arg1 : i32, i32
  }
  func.func @transform_3(%arg0: i32, %arg1: i32) -> (i32, i32) {
    %c0_i32 = arith.constant 0 : i32
    return %arg0, %arg1 : i32, i32
  }
}

module attributes {stable_mosaic.version = 11 : i64} {
  func.func @_matmul_bias_kernel(%arg0: i32, %arg1: i32, %arg2: memref<128x256xbf16, #tpu.memory_space<vmem>>, %arg3: memref<256x128xbf16, #tpu.memory_space<vmem>>, %arg4: memref<1x128xf32, #tpu.memory_space<vmem>>, %arg5: memref<128x128xf32, #tpu.memory_space<vmem>>) attributes {dimension_semantics = [#tpu.dimension_semantics<parallel>, #tpu.dimension_semantics<parallel>], iteration_bounds = array<i64: 1, 1>, scalar_prefetch = 0 : i64, scratch_operands = 0 : i64, tpu.core_type = #tpu.core_type<tc>, window_params = [{transform_indices = @transform_0, window_bounds = array<i64: 128, 256>}, {transform_indices = @transform_1, window_bounds = array<i64: 256, 128>}, {transform_indices = @transform_2, window_bounds = array<i64: 1, 128>}, {transform_indices = @transform_3, window_bounds = array<i64: 128, 128>}]} {
    %c0 = arith.constant 0 : index
    %c0_0 = arith.constant 0 : index
    %0 = vector.load %arg2[%c0, %c0_0] : memref<128x256xbf16, #tpu.memory_space<vmem>>, vector<128x256xbf16>
    %c0_1 = arith.constant 0 : index
    %c0_2 = arith.constant 0 : index
    %1 = vector.load %arg3[%c0_1, %c0_2] : memref<256x128xbf16, #tpu.memory_space<vmem>>, vector<256x128xbf16>
    %cst = arith.constant dense<0.000000e+00> : vector<128x128xf32>
    %2 = tpu.matmul %0, %1, %cst {dimension_numbers = #tpu.dot_dimension_numbers<[1], [0], [0], [1], [0, 0, 1, 1], [], []>} : vector<128x256xbf16>, vector<256x128xbf16>, vector<128x128xf32> -> vector<128x128xf32>
    %c0_3 = arith.constant 0 : index
    %c0_4 = arith.constant 0 : index
    %3 = vector.load %arg4[%c0_3, %c0_4] : memref<1x128xf32, #tpu.memory_space<vmem>>, vector<1x128xf32>
    %4 = vector.broadcast %3 : vector<1x128xf32> to vector<128x128xf32>
    %5 = arith.addf %2, %4 : vector<128x128xf32>
    %c0_5 = arith.constant 0 : index
    %c0_6 = arith.constant 0 : index
    %6 = vector.load %arg5[%c0_5, %c0_6] : memref<128x128xf32, #tpu.memory_space<vmem>>, vector<128x128xf32>
    tpu.vector_store %arg5[%c0_5, %c0_6], %5 {strides = array<i32>} : memref<128x128xf32, #tpu.memory_space<vmem>>, vector<128x128xf32>,
    return
  }
  func.func @transform_0(%arg0: i32, %arg1: i32) -> (i32, i32) {
    %c0_i32 = arith.constant 0 : i32
    %c0_i32_0 = arith.constant 0 : i32
    return %arg0, %c0_i32 : i32, i32
  }
  func.func @transform_1(%arg0: i32, %arg1: i32) -> (i32, i32) {
    %c0_i32 = arith.constant 0 : i32
    %c0_i32_0 = arith.constant 0 : i32
    return %c0_i32, %arg1 : i32, i32
  }
  func.func @transform_2(%arg0: i32, %arg1: i32) -> (i32, i32) {
    %c0_i32 = arith.constant 0 : i32
    %c0_i32_0 = arith.constant 0 : i32
    return %c0_i32, %arg1 : i32, i32
  }
  func.func @transform_3(%arg0: i32, %arg1: i32) -> (i32, i32) {
    %c0_i32 = arith.constant 0 : i32
    return %arg0, %arg1 : i32, i32
  }
}

module attributes {stable_mosaic.version = 11 : i64} {
  func.func @_dwconv_gelu_kernel(%arg0: i32, %arg1: i32, %arg2: memref<1x8x8x256xbf16, #tpu.memory_space<vmem>>, %arg3: memref<9x256xf32, #tpu.memory_space<vmem>>, %arg4: memref<1x256xf32, #tpu.memory_space<vmem>>, %arg5: memref<1x8x8x256xbf16, #tpu.memory_space<vmem>>, %arg6: memref<10x10x256xf32, #tpu.memory_space<vmem>>) attributes {dimension_semantics = [#tpu.dimension_semantics<parallel>, #tpu.dimension_semantics<parallel>], iteration_bounds = array<i64: 2, 1>, scalar_prefetch = 0 : i64, scratch_operands = 1 : i64, tpu.core_type = #tpu.core_type<tc>, window_params = [{transform_indices = @transform_0, window_bounds = array<i64: 1, 8, 8, 256>}, {transform_indices = @transform_1, window_bounds = array<i64: 9, 256>}, {transform_indices = @transform_2, window_bounds = array<i64: 1, 256>}, {transform_indices = @transform_3, window_bounds = array<i64: 1, 8, 8, 256>}]} {
    %cst = arith.constant 0.000000e+00 : f32
    %0 = vector.broadcast %cst : f32 to vector<10x10x256xf32>
    %c0 = arith.constant 0 : index
    %c0_0 = arith.constant 0 : index
    %c0_1 = arith.constant 0 : index
    %1 = vector.load %arg6[%c0, %c0_0, %c0_1] : memref<10x10x256xf32, #tpu.memory_space<vmem>>, vector<10x10x256xf32>
    tpu.vector_store %arg6[%c0, %c0_0, %c0_1], %0 {strides = array<i32>} : memref<10x10x256xf32, #tpu.memory_space<vmem>>, vector<10x10x256xf32>,
    %c0_2 = arith.constant 0 : index
    %c0_3 = arith.constant 0 : index
    %c0_4 = arith.constant 0 : index
    %c0_5 = arith.constant 0 : index
    %2 = vector.load %arg2[%c0_2, %c0_3, %c0_4, %c0_5] : memref<1x8x8x256xbf16, #tpu.memory_space<vmem>>, vector<1x8x8x256xbf16>
    %3 = vector.shape_cast %2 : vector<1x8x8x256xbf16> to vector<8x8x256xbf16>
    %4 = arith.extf %3 : vector<8x8x256xbf16> to vector<8x8x256xf32>
    %c1 = arith.constant 1 : index
    %c1_6 = arith.constant 1 : index
    %c0_7 = arith.constant 0 : index
    %5 = vector.load %arg6[%c1, %c1_6, %c0_7] : memref<10x10x256xf32, #tpu.memory_space<vmem>>, vector<8x8x256xf32>
    tpu.vector_store %arg6[%c1, %c1_6, %c0_7], %4 {strides = array<i32>} : memref<10x10x256xf32, #tpu.memory_space<vmem>>, vector<8x8x256xf32>,
    %c0_8 = arith.constant 0 : index
    %c0_9 = arith.constant 0 : index
    %6 = vector.load %arg3[%c0_8, %c0_9] : memref<9x256xf32, #tpu.memory_space<vmem>>, vector<9x256xf32>
    %c0_10 = arith.constant 0 : index
    %c0_11 = arith.constant 0 : index
    %7 = vector.load %arg4[%c0_10, %c0_11] : memref<1x256xf32, #tpu.memory_space<vmem>>, vector<1x256xf32>
    %c0_12 = arith.constant 0 : index
    %c0_13 = arith.constant 0 : index
    %c0_14 = arith.constant 0 : index
    %8 = vector.load %arg6[%c0_12, %c0_13, %c0_14] : memref<10x10x256xf32, #tpu.memory_space<vmem>>, vector<10x8x256xf32>
    %c0_15 = arith.constant 0 : index
    %c1_16 = arith.constant 1 : index
    %c0_17 = arith.constant 0 : index
    %9 = vector.load %arg6[%c0_15, %c1_16, %c0_17] : memref<10x10x256xf32, #tpu.memory_space<vmem>>, vector<10x8x256xf32>
    %c0_18 = arith.constant 0 : index
    %c2 = arith.constant 2 : index
    %c0_19 = arith.constant 0 : index
    %10 = vector.load %arg6[%c0_18, %c2, %c0_19] : memref<10x10x256xf32, #tpu.memory_space<vmem>>, vector<10x8x256xf32>
    %cst_20 = arith.constant 0.000000e+00 : f32
    %11 = vector.broadcast %cst_20 : f32 to vector<8x8x256xf32>
    %12 = vector.extract_strided_slice %8 {offsets = [0, 0, 0], sizes = [8, 8, 256], strides = [1, 1, 1]} : vector<10x8x256xf32> to vector<8x8x256xf32>
    %13 = vector.extract_strided_slice %6 {offsets = [0, 0], sizes = [1, 256], strides = [1, 1]} : vector<9x256xf32> to vector<1x256xf32>
    %14 = vector.shape_cast %13 : vector<1x256xf32> to vector<256xf32>
    %15 = vector.shape_cast %14 : vector<256xf32> to vector<1x1x256xf32>
    %16 = vector.broadcast %15 : vector<1x1x256xf32> to vector<8x8x256xf32>
    %17 = arith.mulf %12, %16 : vector<8x8x256xf32>
    %18 = arith.addf %11, %17 : vector<8x8x256xf32>
    %19 = vector.extract_strided_slice %9 {offsets = [0, 0, 0], sizes = [8, 8, 256], strides = [1, 1, 1]} : vector<10x8x256xf32> to vector<8x8x256xf32>
    %20 = vector.extract_strided_slice %6 {offsets = [1, 0], sizes = [1, 256], strides = [1, 1]} : vector<9x256xf32> to vector<1x256xf32>
    %21 = vector.shape_cast %20 : vector<1x256xf32> to vector<256xf32>
    %22 = vector.shape_cast %21 : vector<256xf32> to vector<1x1x256xf32>
    %23 = vector.broadcast %22 : vector<1x1x256xf32> to vector<8x8x256xf32>
    %24 = arith.mulf %19, %23 : vector<8x8x256xf32>
    %25 = arith.addf %18, %24 : vector<8x8x256xf32>
    %26 = vector.extract_strided_slice %10 {offsets = [0, 0, 0], sizes = [8, 8, 256], strides = [1, 1, 1]} : vector<10x8x256xf32> to vector<8x8x256xf32>
    %27 = vector.extract_strided_slice %6 {offsets = [2, 0], sizes = [1, 256], strides = [1, 1]} : vector<9x256xf32> to vector<1x256xf32>
    %28 = vector.shape_cast %27 : vector<1x256xf32> to vector<256xf32>
    %29 = vector.shape_cast %28 : vector<256xf32> to vector<1x1x256xf32>
    %30 = vector.broadcast %29 : vector<1x1x256xf32> to vector<8x8x256xf32>
    %31 = arith.mulf %26, %30 : vector<8x8x256xf32>
    %32 = arith.addf %25, %31 : vector<8x8x256xf32>
    %33 = vector.extract_strided_slice %8 {offsets = [1, 0, 0], sizes = [8, 8, 256], strides = [1, 1, 1]} : vector<10x8x256xf32> to vector<8x8x256xf32>
    %34 = vector.extract_strided_slice %6 {offsets = [3, 0], sizes = [1, 256], strides = [1, 1]} : vector<9x256xf32> to vector<1x256xf32>
    %35 = vector.shape_cast %34 : vector<1x256xf32> to vector<256xf32>
    %36 = vector.shape_cast %35 : vector<256xf32> to vector<1x1x256xf32>
    %37 = vector.broadcast %36 : vector<1x1x256xf32> to vector<8x8x256xf32>
    %38 = arith.mulf %33, %37 : vector<8x8x256xf32>
    %39 = arith.addf %32, %38 : vector<8x8x256xf32>
    %40 = vector.extract_strided_slice %9 {offsets = [1, 0, 0], sizes = [8, 8, 256], strides = [1, 1, 1]} : vector<10x8x256xf32> to vector<8x8x256xf32>
    %41 = vector.extract_strided_slice %6 {offsets = [4, 0], sizes = [1, 256], strides = [1, 1]} : vector<9x256xf32> to vector<1x256xf32>
    %42 = vector.shape_cast %41 : vector<1x256xf32> to vector<256xf32>
    %43 = vector.shape_cast %42 : vector<256xf32> to vector<1x1x256xf32>
    %44 = vector.broadcast %43 : vector<1x1x256xf32> to vector<8x8x256xf32>
    %45 = arith.mulf %40, %44 : vector<8x8x256xf32>
    %46 = arith.addf %39, %45 : vector<8x8x256xf32>
    %47 = vector.extract_strided_slice %10 {offsets = [1, 0, 0], sizes = [8, 8, 256], strides = [1, 1, 1]} : vector<10x8x256xf32> to vector<8x8x256xf32>
    %48 = vector.extract_strided_slice %6 {offsets = [5, 0], sizes = [1, 256], strides = [1, 1]} : vector<9x256xf32> to vector<1x256xf32>
    %49 = vector.shape_cast %48 : vector<1x256xf32> to vector<256xf32>
    %50 = vector.shape_cast %49 : vector<256xf32> to vector<1x1x256xf32>
    %51 = vector.broadcast %50 : vector<1x1x256xf32> to vector<8x8x256xf32>
    %52 = arith.mulf %47, %51 : vector<8x8x256xf32>
    %53 = arith.addf %46, %52 : vector<8x8x256xf32>
    %54 = vector.extract_strided_slice %8 {offsets = [2, 0, 0], sizes = [8, 8, 256], strides = [1, 1, 1]} : vector<10x8x256xf32> to vector<8x8x256xf32>
    %55 = vector.extract_strided_slice %6 {offsets = [6, 0], sizes = [1, 256], strides = [1, 1]} : vector<9x256xf32> to vector<1x256xf32>
    %56 = vector.shape_cast %55 : vector<1x256xf32> to vector<256xf32>
    %57 = vector.shape_cast %56 : vector<256xf32> to vector<1x1x256xf32>
    %58 = vector.broadcast %57 : vector<1x1x256xf32> to vector<8x8x256xf32>
    %59 = arith.mulf %54, %58 : vector<8x8x256xf32>
    %60 = arith.addf %53, %59 : vector<8x8x256xf32>
    %61 = vector.extract_strided_slice %9 {offsets = [2, 0, 0], sizes = [8, 8, 256], strides = [1, 1, 1]} : vector<10x8x256xf32> to vector<8x8x256xf32>
    %62 = vector.extract_strided_slice %6 {offsets = [7, 0], sizes = [1, 256], strides = [1, 1]} : vector<9x256xf32> to vector<1x256xf32>
    %63 = vector.shape_cast %62 : vector<1x256xf32> to vector<256xf32>
    %64 = vector.shape_cast %63 : vector<256xf32> to vector<1x1x256xf32>
    %65 = vector.broadcast %64 : vector<1x1x256xf32> to vector<8x8x256xf32>
    %66 = arith.mulf %61, %65 : vector<8x8x256xf32>
    %67 = arith.addf %60, %66 : vector<8x8x256xf32>
    %68 = vector.extract_strided_slice %10 {offsets = [2, 0, 0], sizes = [8, 8, 256], strides = [1, 1, 1]} : vector<10x8x256xf32> to vector<8x8x256xf32>
    %69 = vector.extract_strided_slice %6 {offsets = [8, 0], sizes = [1, 256], strides = [1, 1]} : vector<9x256xf32> to vector<1x256xf32>
    %70 = vector.shape_cast %69 : vector<1x256xf32> to vector<256xf32>
    %71 = vector.shape_cast %70 : vector<256xf32> to vector<1x1x256xf32>
    %72 = vector.broadcast %71 : vector<1x1x256xf32> to vector<8x8x256xf32>
    %73 = arith.mulf %68, %72 : vector<8x8x256xf32>
    %74 = arith.addf %67, %73 : vector<8x8x256xf32>
    %75 = vector.shape_cast %7 : vector<1x256xf32> to vector<1x1x256xf32>
    %76 = vector.broadcast %75 : vector<1x1x256xf32> to vector<8x8x256xf32>
    %77 = arith.addf %74, %76 : vector<8x8x256xf32>
    %cst_21 = arith.constant 5.000000e-01 : f32
    %78 = vector.broadcast %cst_21 : f32 to vector<8x8x256xf32>
    %79 = arith.mulf %78, %77 : vector<8x8x256xf32>
    %cst_22 = arith.constant 0.707106769 : f32
    %80 = vector.broadcast %cst_22 : f32 to vector<8x8x256xf32>
    %81 = arith.mulf %77, %80 : vector<8x8x256xf32>
    %82 = math.erf %81 : vector<8x8x256xf32>
    %cst_23 = arith.constant 1.000000e+00 : f32
    %83 = vector.broadcast %cst_23 : f32 to vector<8x8x256xf32>
    %84 = arith.addf %83, %82 : vector<8x8x256xf32>
    %85 = arith.mulf %79, %84 : vector<8x8x256xf32>
    %86 = arith.truncf %85 : vector<8x8x256xf32> to vector<8x8x256xbf16>
    %c0_24 = arith.constant 0 : index
    %c0_25 = arith.constant 0 : index
    %c0_26 = arith.constant 0 : index
    %c0_27 = arith.constant 0 : index
    %87 = vector.load %arg5[%c0_24, %c0_25, %c0_26, %c0_27] : memref<1x8x8x256xbf16, #tpu.memory_space<vmem>>, vector<1x8x8x256xbf16>
    %88 = vector.shape_cast %87 : vector<1x8x8x256xbf16> to vector<8x8x256xbf16>
    %89 = vector.shape_cast %86 : vector<8x8x256xbf16> to vector<1x8x8x256xbf16>
    tpu.vector_store %arg5[%c0_24, %c0_25, %c0_26, %c0_27], %89 {strides = array<i32>} : memref<1x8x8x256xbf16, #tpu.memory_space<vmem>>, vector<1x8x8x256xbf16>,
    return
  }
  func.func @transform_0(%arg0: i32, %arg1: i32) -> (i32, i32, i32, i32) {
    %c0_i32 = arith.constant 0 : i32
    %c0_i32_0 = arith.constant 0 : i32
    %c0_i32_1 = arith.constant 0 : i32
    return %arg0, %c0_i32, %c0_i32_0, %arg1 : i32, i32, i32, i32
  }
  func.func @transform_1(%arg0: i32, %arg1: i32) -> (i32, i32) {
    %c0_i32 = arith.constant 0 : i32
    %c0_i32_0 = arith.constant 0 : i32
    return %c0_i32, %arg1 : i32, i32
  }
  func.func @transform_2(%arg0: i32, %arg1: i32) -> (i32, i32) {
    %c0_i32 = arith.constant 0 : i32
    %c0_i32_0 = arith.constant 0 : i32
    return %c0_i32, %arg1 : i32, i32
  }
  func.func @transform_3(%arg0: i32, %arg1: i32) -> (i32, i32, i32, i32) {
    %c0_i32 = arith.constant 0 : i32
    %c0_i32_0 = arith.constant 0 : i32
    %c0_i32_1 = arith.constant 0 : i32
    return %arg0, %c0_i32, %c0_i32_0, %arg1 : i32, i32, i32, i32
  }
}

</mosaic_0001>

<llo_original>
// kernel: _lambda_.3
$region0: #{_lambda_.3}
  #allocation0 [shape = 'u32[]', space=smem, size = 0x4, offset = 0x4, fixed_abs, tag = 'smem constant byte address 0x4 - core index']
  #allocation1 [shape = 'u32[144,128]{1,0:T(1,128)}', space=vmem, size = 0x12000, scoped, tag = 'internal scratch']
  %s0 = inlined_call_operand.hbm [shape: f32[128,128], index: 0, kind: input, shape index: {}]
  %s1 = inlined_call_operand.hbm [shape: bf16[128,256], index: 1, kind: input, shape index: {}]
  %s2 = inlined_call_operand.vmem [shape: f32[1,256], index: 2, kind: input, shape index: {}]
  %s3 = inlined_call_operand.vmem [shape: bf16[128,256], index: 3, kind: output, shape index: {}]
  %s4 = sld [smem:[#allocation0]]
  $region30: #{_lambda_.3} parent=0
    _
  %s6 = ssub.s32 1, %s4
  %s7 = scalar_select 0, %s6, %s4
  $region1: #{_lambda_.3} parent=0
    #allocation2 [shape = 'u8[65536]{0}', space=vmem, size = 0x10000, scoped, tag = 'input window, operand 0, single buffered']
    #allocation3 [shape = 's32[1]{0}', space=sflag, size = 0x4, scoped, tag = 'scoped memory for _lambda_.3']
    #allocation4 [shape = 'u8[65536]{0}', space=vmem, size = 0x10000, scoped, tag = 'input window, operand 1, single buffered']
    #allocation5 [shape = 's32[1]{0}', space=sflag, size = 0x4, scoped, tag = 'scoped memory for _lambda_.3']
    %8 = vsyncpa [#allocation3], 0
    %9 = vsyncpa [#allocation5], 0
    // Predicated region
    $region2: #{_lambda_.3} parent=1 // pred_check
      _
    $region3: #{_lambda_.3} parent=1 // pred_check_branch
      %11 = sbr.rel (0) target = $region5
    $region4: #{_lambda_.3} parent=1 // pred_region
      %s13 = ssub.s32 2048, 2048
      %14 = vsyncadd [#allocation3], %s13
      %s15 = sshll.u32 [#allocation2], 4
      %s16 = int_to_ptr.vmem [resolvable:$true] %s15
      %21 = dma.hbm_to_vmem [thread:$0]  %s0, 2048, %s16, [#allocation3], 128, 128, 8
    $region5: #{_lambda_.3} parent=1 // pred_fallthru
      _
    // Predicated region
    $region6: #{_lambda_.3} parent=1 // pred_check
      _
    $region7: #{_lambda_.3} parent=1 // pred_check_branch
      %23 = sbr.rel (0) target = $region9
    $region8: #{_lambda_.3} parent=1 // pred_region
      %s25 = ssub.s32 2048, 2048
      %26 = vsyncadd [#allocation5], %s25
      %s27 = sshll.u32 [#allocation4], 4
      %s28 = int_to_ptr.vmem [resolvable:$true] %s27
      %33 = dma.hbm_to_vmem [thread:$0]  %s1, 2048, %s28, [#allocation5], 128, 128, 8
    $region9: #{_lambda_.3} parent=1 // pred_fallthru
      _
    // Predicated region
    $region10: #{_lambda_.3} parent=1 // pred_check
      _
    $region11: #{_lambda_.3} parent=1 // pred_check_branch
      %35 = sbr.rel (0) target = $region13
    $region12: #{_lambda_.3} parent=1 // pred_region
      _
    $region13: #{_lambda_.3} parent=1 // pred_fallthru
      _
    // Predicated region
    $region14: #{_lambda_.3} parent=1 // pred_check
      _
    $region15: #{_lambda_.3} parent=1 // pred_check_branch
      %37 = sbr.rel (0) target = $region17
    $region16: #{_lambda_.3} parent=1 // pred_region
      %38 = dma.done [#allocation3], 2048
    $region17: #{_lambda_.3} parent=1 // pred_fallthru
      _
    // Predicated region
    $region18: #{_lambda_.3} parent=1 // pred_check
      _
    $region19: #{_lambda_.3} parent=1 // pred_check_branch
      %40 = sbr.rel (0) target = $region21
    $region20: #{_lambda_.3} parent=1 // pred_region
      %41 = dma.done [#allocation5], 2048
    $region21: #{_lambda_.3} parent=1 // pred_fallthru
      _
    %v43 = vld [vmem:[#allocation2] sm:$0xff]
    %v44 = vld [vmem:[#allocation2 + $0x8] sm:$0xff]
    %v45 = vld [vmem:[#allocation2 + $0x10] sm:$0xff]
    %v46 = vld [vmem:[#allocation2 + $0x18] sm:$0xff]
    %v47 = vld [vmem:[#allocation2 + $0x20] sm:$0xff]
    %v48 = vld [vmem:[#allocation2 + $0x28] sm:$0xff]
    %v49 = vld [vmem:[#allocation2 + $0x30] sm:$0xff]
    %v50 = vld [vmem:[#allocation2 + $0x38] sm:$0xff]
    %v51 = vld [vmem:[#allocation2 + $0x40] sm:$0xff]
    %v52 = vld [vmem:[#allocation2 + $0x48] sm:$0xff]
    %v53 = vld [vmem:[#allocation2 + $0x50] sm:$0xff]
    %v54 = vld [vmem:[#allocation2 + $0x58] sm:$0xff]
    %v55 = vld [vmem:[#allocation2 + $0x60] sm:$0xff]
    %v56 = vld [vmem:[#allocation2 + $0x68] sm:$0xff]
    %v57 = vld [vmem:[#allocation2 + $0x70] sm:$0xff]
    %v58 = vld [vmem:[#allocation2 + $0x78] sm:$0xff]
    %v59 = vpack.c.bf16 %v44, %v43
    %v60 = vpack.c.bf16 %v46, %v45
    %v61 = vpack.c.bf16 %v48, %v47
    %v62 = vpack.c.bf16 %v50, %v49
    %v63 = vpack.c.bf16 %v52, %v51
    %v64 = vpack.c.bf16 %v54, %v53
    %v65 = vpack.c.bf16 %v56, %v55
    %v66 = vpack.c.bf16 %v58, %v57
    %v67 = vld [vmem:[#allocation4] sm:$0xff]
    %v68 = vld [vmem:[#allocation4 + $0x8] sm:$0xff]
    %v69 = vld [vmem:[#allocation4 + $0x10] sm:$0xff]
    %v70 = vld [vmem:[#allocation4 + $0x18] sm:$0xff]
    %v71 = vld [vmem:[#allocation4 + $0x20] sm:$0xff]
    %v72 = vld [vmem:[#allocation4 + $0x28] sm:$0xff]
    %v73 = vld [vmem:[#allocation4 + $0x30] sm:$0xff]
    %v74 = vld [vmem:[#allocation4 + $0x38] sm:$0xff]
    %v75 = vld [vmem:[#allocation4 + $0x40] sm:$0xff]
    %v76 = vld [vmem:[#allocation4 + $0x48] sm:$0xff]
    %v77 = vld [vmem:[#allocation4 + $0x50] sm:$0xff]
    %v78 = vld [vmem:[#allocation4 + $0x58] sm:$0xff]
    %v79 = vld [vmem:[#allocation4 + $0x60] sm:$0xff]
    %v80 = vld [vmem:[#allocation4 + $0x68] sm:$0xff]
    %v81 = vld [vmem:[#allocation4 + $0x70] sm:$0xff]
    %v82 = vld [vmem:[#allocation4 + $0x78] sm:$0xff]
    %v83 = vld [vmem:[%s2] sm:$0x3]
    %v85 = vlaneseq
    %v86 = vshrl.u32 %v85, 7
    %v87 = vsub.s32 0, %v86
    %v88 = vrot.slane %v83, %v87
    %v89 = vlaneseq
    %v90 = vshrl.u32 %v89, 7
    %v91 = vsub.s32 1, %v90
    %v92 = vrot.slane %v83, %v91
    %v111 = vunpack.c.l.b16 %v67
    %v112 = vunpack.c.h.b16 %v67
    %v113 = vunpack.c.l.b16 %v68
    %v114 = vunpack.c.h.b16 %v68
    %v115 = vunpack.c.l.b16 %v69
    %v116 = vunpack.c.h.b16 %v69
    %v117 = vunpack.c.l.b16 %v70
    %v118 = vunpack.c.h.b16 %v70
    %v119 = vunpack.c.l.b16 %v71
    %v120 = vunpack.c.h.b16 %v71
    %v121 = vunpack.c.l.b16 %v72
    %v122 = vunpack.c.h.b16 %v72
    %v123 = vunpack.c.l.b16 %v73
    %v124 = vunpack.c.h.b16 %v73
    %v125 = vunpack.c.l.b16 %v74
    %v126 = vunpack.c.h.b16 %v74
    %v127 = vunpack.c.l.b16 %v75
    %v128 = vunpack.c.h.b16 %v75
    %v129 = vunpack.c.l.b16 %v76
    %v130 = vunpack.c.h.b16 %v76
    %v131 = vunpack.c.l.b16 %v77
    %v132 = vunpack.c.h.b16 %v77
    %v133 = vunpack.c.l.b16 %v78
    %v134 = vunpack.c.h.b16 %v78
    %v135 = vunpack.c.l.b16 %v79
    %v136 = vunpack.c.h.b16 %v79
    %v137 = vunpack.c.l.b16 %v80
    %v138 = vunpack.c.h.b16 %v80
    %v139 = vunpack.c.l.b16 %v81
    %v140 = vunpack.c.h.b16 %v81
    %v141 = vunpack.c.l.b16 %v82
    %v142 = vunpack.c.h.b16 %v82
    %v143 = vpack.c.b16 %v113, %v111
    %v144 = vpack.c.b16 %v114, %v112
    %v145 = vpack.c.b16 %v117, %v115
    %v146 = vpack.c.b16 %v118, %v116
    %v147 = vpack.c.b16 %v121, %v119
    %v148 = vpack.c.b16 %v122, %v120
    %v149 = vpack.c.b16 %v125, %v123
    %v150 = vpack.c.b16 %v126, %v124
    %v151 = vpack.c.b16 %v129, %v127
    %v152 = vpack.c.b16 %v130, %v128
    %v153 = vpack.c.b16 %v133, %v131
    %v154 = vpack.c.b16 %v134, %v132
    %v155 = vpack.c.b16 %v137, %v135
    %v156 = vpack.c.b16 %v138, %v136
    %v157 = vpack.c.b16 %v141, %v139
    %v158 = vpack.c.b16 %v142, %v140
    %175 = vmatprep.subr.bf16.mxu0 %v158
    %176 = vmatpush1.bf16.msra.mxu0 %v157
    %177 = vmatprep.subr.bf16.mxu0 %v156
    %178 = vmatpush1.bf16.msra.mxu0 %v155
    %179 = vmatprep.subr.bf16.mxu0 %v154
    %180 = vmatpush1.bf16.msra.mxu0 %v153
    %181 = vmatprep.subr.bf16.mxu0 %v152
    %182 = vmatpush1.bf16.msra.mxu0 %v151
    %183 = vmatprep.subr.bf16.mxu0 %v150
    %184 = vmatpush1.bf16.msra.mxu0 %v149
    %185 = vmatprep.subr.bf16.mxu0 %v148
    %186 = vmatpush1.bf16.msra.mxu0 %v147
    %187 = vmatprep.subr.bf16.mxu0 %v146
    %188 = vmatpush1.bf16.msra.mxu0 %v145
    %189 = vmatprep.subr.bf16.mxu0 %v144
    %190 = vmatpush1.bf16.msra.mxu0 %v143
    %191 = vmatprep.subr.bf16.mxu0 0
    %192 = vmatpush2.bf16.msra.mxu0 0
    %193 = vmatprep.subr.bf16.mxu0 0
    %194 = vmatpush2.bf16.msra.mxu0 0
    %195 = vmatprep.subr.bf16.mxu0 0
    %196 = vmatpush2.bf16.msra.mxu0 0
    %197 = vmatprep.subr.bf16.mxu0 0
    %198 = vmatpush2.bf16.msra.mxu0 0
    %199 = vmatprep.subr.bf16.mxu0 0
    %200 = vmatpush2.bf16.msra.mxu0 0
    %201 = vmatprep.subr.bf16.mxu0 0
    %202 = vmatpush2.bf16.msra.mxu0 0
    %203 = vmatprep.subr.bf16.mxu0 0
    %204 = vmatpush2.bf16.msra.mxu0 0
    %205 = vmatprep.subr.bf16.mxu0 0
    %206 = vmatpush2.bf16.msra.mxu0 0
    %207 = vmatprep.mubr.bf16.mxu0 0
    %208 = vmatmul.mubr.bf16.gmra.mxu0 %v59
    %v209 = vpop.f32.mrf.mxu0
    %v210 = vadd.f32 %v88, %v209
    %v211 = vpop.f32.mrf.mxu0
    %v212 = vadd.f32 %v92, %v211
    %v213 = vpop.f32.mrf.mxu0
    %v214 = vadd.f32 %v88, %v213
    %v215 = vpop.f32.mrf.mxu0
    %v216 = vadd.f32 %v92, %v215
    %217 = vmatprep.mubr.bf16.mxu0 0
    %218 = vmatmul.mubr.bf16.gmra.mxu0 %v60
    %v219 = vpop.f32.mrf.mxu0
    %v220 = vadd.f32 %v88, %v219
    %v221 = vpop.f32.mrf.mxu0
    %v222 = vadd.f32 %v92, %v221
    %v223 = vpop.f32.mrf.mxu0
    %v224 = vadd.f32 %v88, %v223
    %v225 = vpop.f32.mrf.mxu0
    %v226 = vadd.f32 %v92, %v225
    %227 = vmatprep.mubr.bf16.mxu0 0
    %228 = vmatmul.mubr.bf16.gmra.mxu0 %v61
    %v229 = vpop.f32.mrf.mxu0
    %v230 = vadd.f32 %v88, %v229
    %v231 = vpop.f32.mrf.mxu0
    %v232 = vadd.f32 %v92, %v231
    %v233 = vpop.f32.mrf.mxu0
    %v234 = vadd.f32 %v88, %v233
    %v235 = vpop.f32.mrf.mxu0
    %v236 = vadd.f32 %v92, %v235
    %237 = vmatprep.mubr.bf16.mxu0 0
    %238 = vmatmul.mubr.bf16.gmra.mxu0 %v62
    %v239 = vpop.f32.mrf.mxu0
    %v240 = vadd.f32 %v88, %v239
    %v241 = vpop.f32.mrf.mxu0
    %v242 = vadd.f32 %v92, %v241
    %v243 = vpop.f32.mrf.mxu0
    %v244 = vadd.f32 %v88, %v243
    %v245 = vpop.f32.mrf.mxu0
    %v246 = vadd.f32 %v92, %v245
    %247 = vmatprep.mubr.bf16.mxu0 0
    %248 = vmatmul.mubr.bf16.gmra.mxu0 %v63
    %v249 = vpop.f32.mrf.mxu0
    %v250 = vadd.f32 %v88, %v249
    %v251 = vpop.f32.mrf.mxu0
    %v252 = vadd.f32 %v92, %v251
    %v253 = vpop.f32.mrf.mxu0
    %v254 = vadd.f32 %v88, %v253
    %v255 = vpop.f32.mrf.mxu0
    %v256 = vadd.f32 %v92, %v255
    %257 = vmatprep.mubr.bf16.mxu0 0
    %258 = vmatmul.mubr.bf16.gmra.mxu0 %v64
    %v259 = vpop.f32.mrf.mxu0
    %v260 = vadd.f32 %v88, %v259
    %v261 = vpop.f32.mrf.mxu0
    %v262 = vadd.f32 %v92, %v261
    %v263 = vpop.f32.mrf.mxu0
    %v264 = vadd.f32 %v88, %v263
    %v265 = vpop.f32.mrf.mxu0
    %v266 = vadd.f32 %v92, %v265
    %267 = vmatprep.mubr.bf16.mxu0 0
    %268 = vmatmul.mubr.bf16.gmra.mxu0 %v65
    %v269 = vpop.f32.mrf.mxu0
    %v270 = vadd.f32 %v88, %v269
    %v271 = vpop.f32.mrf.mxu0
    %v272 = vadd.f32 %v92, %v271
    %v273 = vpop.f32.mrf.mxu0
    %v274 = vadd.f32 %v88, %v273
    %v275 = vpop.f32.mrf.mxu0
    %v276 = vadd.f32 %v92, %v275
    %277 = vmatprep.mubr.bf16.mxu0 0
    %278 = vmatmul.mubr.bf16.gmra.mxu0 %v66
    %v279 = vpop.f32.mrf.mxu0
    %v280 = vadd.f32 %v88, %v279
    %v281 = vpop.f32.mrf.mxu0
    %v282 = vadd.f32 %v92, %v281
    %v283 = vpop.f32.mrf.mxu0
    %v284 = vadd.f32 %v88, %v283
    %v285 = vpop.f32.mrf.mxu0
    %v286 = vadd.f32 %v92, %v285
    %287 = vdwg.mxu0
    %v288 = vpack.c.bf16 %v214, %v210
    %v289 = vpack.c.bf16 %v216, %v212
    %v290 = vpack.c.bf16 %v224, %v220
    %v291 = vpack.c.bf16 %v226, %v222
    %v292 = vpack.c.bf16 %v234, %v230
    %v293 = vpack.c.bf16 %v236, %v232
    %v294 = vpack.c.bf16 %v244, %v240
    %v295 = vpack.c.bf16 %v246, %v242
    %v296 = vpack.c.bf16 %v254, %v250
    %v297 = vpack.c.bf16 %v256, %v252
    %v298 = vpack.c.bf16 %v264, %v260
    %v299 = vpack.c.bf16 %v266, %v262
    %v300 = vpack.c.bf16 %v274, %v270
    %v301 = vpack.c.bf16 %v276, %v272
    %v302 = vpack.c.bf16 %v284, %v280
    %v303 = vpack.c.bf16 %v286, %v282
    %v320 = vunpack.c.l.b16 %v288
    %v321 = vunpack.c.l.b16 %v289
    %v322 = vunpack.c.h.b16 %v288
    %v323 = vunpack.c.h.b16 %v289
    %v324 = vunpack.c.l.b16 %v290
    %v325 = vunpack.c.l.b16 %v291
    %v326 = vunpack.c.h.b16 %v290
    %v327 = vunpack.c.h.b16 %v291
    %v328 = vunpack.c.l.b16 %v292
    %v329 = vunpack.c.l.b16 %v293
    %v330 = vunpack.c.h.b16 %v292
    %v331 = vunpack.c.h.b16 %v293
    %v332 = vunpack.c.l.b16 %v294
    %v333 = vunpack.c.l.b16 %v295
    %v334 = vunpack.c.h.b16 %v294
    %v335 = vunpack.c.h.b16 %v295
    %v336 = vunpack.c.l.b16 %v296
    %v337 = vunpack.c.l.b16 %v297
    %v338 = vunpack.c.h.b16 %v296
    %v339 = vunpack.c.h.b16 %v297
    %v340 = vunpack.c.l.b16 %v298
    %v341 = vunpack.c.l.b16 %v299
    %v342 = vunpack.c.h.b16 %v298
    %v343 = vunpack.c.h.b16 %v299
    %v344 = vunpack.c.l.b16 %v300
    %v345 = vunpack.c.l.b16 %v301
    %v346 = vunpack.c.h.b16 %v300
    %v347 = vunpack.c.h.b16 %v301
    %v348 = vunpack.c.l.b16 %v302
    %v349 = vunpack.c.l.b16 %v303
    %v350 = vunpack.c.h.b16 %v302
    %v351 = vunpack.c.h.b16 %v303
    %v352 = vpack.c.b16 %v321, %v320
    %v353 = vpack.c.b16 %v323, %v322
    %v354 = vpack.c.b16 %v325, %v324
    %v355 = vpack.c.b16 %v327, %v326
    %v356 = vpack.c.b16 %v329, %v328
    %v357 = vpack.c.b16 %v331, %v330
    %v358 = vpack.c.b16 %v333, %v332
    %v359 = vpack.c.b16 %v335, %v334
    %v360 = vpack.c.b16 %v337, %v336
    %v361 = vpack.c.b16 %v339, %v338
    %v362 = vpack.c.b16 %v341, %v340
    %v363 = vpack.c.b16 %v343, %v342
    %v364 = vpack.c.b16 %v345, %v344
    %v365 = vpack.c.b16 %v347, %v346
    %v366 = vpack.c.b16 %v349, %v348
    %v367 = vpack.c.b16 %v351, %v350
    %384 = vst [vmem:[%s3] sm:$0xff] %v352
    %385 = vst [vmem:[%s3 + $0x8] sm:$0xff] %v353
    %386 = vst [vmem:[%s3 + $0x10] sm:$0xff] %v354
    %387 = vst [vmem:[%s3 + $0x18] sm:$0xff] %v355
    %388 = vst [vmem:[%s3 + $0x20] sm:$0xff] %v356
    %389 = vst [vmem:[%s3 + $0x28] sm:$0xff] %v357
    %390 = vst [vmem:[%s3 + $0x30] sm:$0xff] %v358
    %391 = vst [vmem:[%s3 + $0x38] sm:$0xff] %v359
    %392 = vst [vmem:[%s3 + $0x40] sm:$0xff] %v360
    %393 = vst [vmem:[%s3 + $0x48] sm:$0xff] %v361
    %394 = vst [vmem:[%s3 + $0x50] sm:$0xff] %v362
    %395 = vst [vmem:[%s3 + $0x58] sm:$0xff] %v363
    %396 = vst [vmem:[%s3 + $0x60] sm:$0xff] %v364
    %397 = vst [vmem:[%s3 + $0x68] sm:$0xff] %v365
    %398 = vst [vmem:[%s3 + $0x70] sm:$0xff] %v366
    %399 = vst [vmem:[%s3 + $0x78] sm:$0xff] %v367
    // Predicated region
    $region22: #{_lambda_.3} parent=1 // pred_check
      _
    $region23: #{_lambda_.3} parent=1 // pred_check_branch
      %401 = sbr.rel (0) target = $region25
    $region24: #{_lambda_.3} parent=1 // pred_region
      _
    $region25: #{_lambda_.3} parent=1 // pred_fallthru
      _
    // Predicated region
    $region26: #{_lambda_.3} parent=1 // pred_check
      _
    $region27: #{_lambda_.3} parent=1 // pred_check_branch
      %403 = sbr.rel (0) target = $region29
    $region28: #{_lambda_.3} parent=1 // pred_region
      _
    $region29: #{_lambda_.3} parent=1 // pred_fallthru
      _
    %404 = vsyncpa [#allocation3], 1
    %405 = vsyncpa [#allocation5], 1

// kernel: _lambda_.5
$region0: #{_lambda_.5}
  #allocation0 [shape = 'u32[]', space=smem, size = 0x4, offset = 0x4, fixed_abs, tag = 'smem constant byte address 0x4 - core index']
  #allocation1 [shape = 'u32[144,128]{1,0:T(1,128)}', space=vmem, size = 0x12000, scoped, tag = 'internal scratch']
  %s0 = inlined_call_operand.vmem [shape: bf16[128,256], index: 0, kind: input, shape index: {}]
  %s1 = inlined_call_operand.vmem [shape: bf16[256,128], index: 1, kind: input, shape index: {}]
  %s2 = inlined_call_operand.vmem [shape: f32[1,128], index: 2, kind: input, shape index: {}]
  %s3 = inlined_call_operand.hbm [shape: f32[128,128], index: 3, kind: output, shape index: {}]
  %s4 = sld [smem:[#allocation0]]
  $region22: #{_lambda_.5} parent=0
    _
  %s6 = ssub.s32 1, %s4
  %s7 = scalar_select 0, %s6, %s4
  $region1: #{_lambda_.5} parent=0
    #allocation2 [shape = 'u8[65536]{0}', space=vmem, size = 0x10000, scoped, tag = 'output window, operand 0, single buffered']
    #allocation3 [shape = 's32[1]{0}', space=sflag, size = 0x4, scoped, tag = 'scoped memory for _lambda_.5']
    %8 = vsyncpa [#allocation3], 0
    // Predicated region
    $region2: #{_lambda_.5} parent=1 // pred_check
      _
    $region3: #{_lambda_.5} parent=1 // pred_check_branch
      %10 = sbr.rel (0) target = $region5
    $region4: #{_lambda_.5} parent=1 // pred_region
      _
    $region5: #{_lambda_.5} parent=1 // pred_fallthru
      _
    // Predicated region
    $region6: #{_lambda_.5} parent=1 // pred_check
      _
    $region7: #{_lambda_.5} parent=1 // pred_check_branch
      %12 = sbr.rel (0) target = $region9
    $region8: #{_lambda_.5} parent=1 // pred_region
      _
    $region9: #{_lambda_.5} parent=1 // pred_fallthru
      _
    // Predicated region
    $region10: #{_lambda_.5} parent=1 // pred_check
      _
    $region11: #{_lambda_.5} parent=1 // pred_check_branch
      %14 = sbr.rel (0) target = $region13
    $region12: #{_lambda_.5} parent=1 // pred_region
      _
    $region13: #{_lambda_.5} parent=1 // pred_fallthru
      _
    %v16 = vld [vmem:[%s0] sm:$0xff]
    %v17 = vld [vmem:[%s0 + $0x8] sm:$0xff]
    %v18 = vld [vmem:[%s0 + $0x10] sm:$0xff]
    %v19 = vld [vmem:[%s0 + $0x18] sm:$0xff]
    %v20 = vld [vmem:[%s0 + $0x20] sm:$0xff]
    %v21 = vld [vmem:[%s0 + $0x28] sm:$0xff]
    %v22 = vld [vmem:[%s0 + $0x30] sm:$0xff]
    %v23 = vld [vmem:[%s0 + $0x38] sm:$0xff]
    %v24 = vld [vmem:[%s0 + $0x40] sm:$0xff]
    %v25 = vld [vmem:[%s0 + $0x48] sm:$0xff]
    %v26 = vld [vmem:[%s0 + $0x50] sm:$0xff]
    %v27 = vld [vmem:[%s0 + $0x58] sm:$0xff]
    %v28 = vld [vmem:[%s0 + $0x60] sm:$0xff]
    %v29 = vld [vmem:[%s0 + $0x68] sm:$0xff]
    %v30 = vld [vmem:[%s0 + $0x70] sm:$0xff]
    %v31 = vld [vmem:[%s0 + $0x78] sm:$0xff]
    %v32 = vld [vmem:[%s1] sm:$0xf]
    %v33 = vld [vmem:[%s1 + $0x4] sm:$0xf]
    %v34 = vld [vmem:[%s1 + $0x8] sm:$0xf]
    %v35 = vld [vmem:[%s1 + $0xc] sm:$0xf]
    %v36 = vld [vmem:[%s1 + $0x10] sm:$0xf]
    %v37 = vld [vmem:[%s1 + $0x14] sm:$0xf]
    %v38 = vld [vmem:[%s1 + $0x18] sm:$0xf]
    %v39 = vld [vmem:[%s1 + $0x1c] sm:$0xf]
    %v40 = vld [vmem:[%s1 + $0x20] sm:$0xf]
    %v41 = vld [vmem:[%s1 + $0x24] sm:$0xf]
    %v42 = vld [vmem:[%s1 + $0x28] sm:$0xf]
    %v43 = vld [vmem:[%s1 + $0x2c] sm:$0xf]
    %v44 = vld [vmem:[%s1 + $0x30] sm:$0xf]
    %v45 = vld [vmem:[%s1 + $0x34] sm:$0xf]
    %v46 = vld [vmem:[%s1 + $0x38] sm:$0xf]
    %v47 = vld [vmem:[%s1 + $0x3c] sm:$0xf]
    %v48 = vld [vmem:[%s1 + $0x40] sm:$0xf]
    %v49 = vld [vmem:[%s1 + $0x44] sm:$0xf]
    %v50 = vld [vmem:[%s1 + $0x48] sm:$0xf]
    %v51 = vld [vmem:[%s1 + $0x4c] sm:$0xf]
    %v52 = vld [vmem:[%s1 + $0x50] sm:$0xf]
    %v53 = vld [vmem:[%s1 + $0x54] sm:$0xf]
    %v54 = vld [vmem:[%s1 + $0x58] sm:$0xf]
    %v55 = vld [vmem:[%s1 + $0x5c] sm:$0xf]
    %v56 = vld [vmem:[%s1 + $0x60] sm:$0xf]
    %v57 = vld [vmem:[%s1 + $0x64] sm:$0xf]
    %v58 = vld [vmem:[%s1 + $0x68] sm:$0xf]
    %v59 = vld [vmem:[%s1 + $0x6c] sm:$0xf]
    %v60 = vld [vmem:[%s1 + $0x70] sm:$0xf]
    %v61 = vld [vmem:[%s1 + $0x74] sm:$0xf]
    %v62 = vld [vmem:[%s1 + $0x78] sm:$0xf]
    %v63 = vld [vmem:[%s1 + $0x7c] sm:$0xf]
    %v64 = vld [vmem:[%s2] sm:$0x1]
    %v66 = vlaneseq
    %v67 = vshrl.u32 %v66, 7
    %v68 = vsub.s32 0, %v67
    %v69 = vrot.slane %v64, %v68
    %v87 = vunpack.c.l.b16 %v16
    %v88 = vunpack.c.h.b16 %v16
    %v89 = vunpack.c.l.b16 %v17
    %v90 = vunpack.c.h.b16 %v17
    %v91 = vunpack.c.l.b16 %v18
    %v92 = vunpack.c.h.b16 %v18
    %v93 = vunpack.c.l.b16 %v19
    %v94 = vunpack.c.h.b16 %v19
    %v95 = vunpack.c.l.b16 %v20
    %v96 = vunpack.c.h.b16 %v20
    %v97 = vunpack.c.l.b16 %v21
    %v98 = vunpack.c.h.b16 %v21
    %v99 = vunpack.c.l.b16 %v22
    %v100 = vunpack.c.h.b16 %v22
    %v101 = vunpack.c.l.b16 %v23
    %v102 = vunpack.c.h.b16 %v23
    %v103 = vunpack.c.l.b16 %v24
    %v104 = vunpack.c.h.b16 %v24
    %v105 = vunpack.c.l.b16 %v25
    %v106 = vunpack.c.h.b16 %v25
    %v107 = vunpack.c.l.b16 %v26
    %v108 = vunpack.c.h.b16 %v26
    %v109 = vunpack.c.l.b16 %v27
    %v110 = vunpack.c.h.b16 %v27
    %v111 = vunpack.c.l.b16 %v28
    %v112 = vunpack.c.h.b16 %v28
    %v113 = vunpack.c.l.b16 %v29
    %v114 = vunpack.c.h.b16 %v29
    %v115 = vunpack.c.l.b16 %v30
    %v116 = vunpack.c.h.b16 %v30
    %v117 = vunpack.c.l.b16 %v31
    %v118 = vunpack.c.h.b16 %v31
    %v119 = vpack.c.b16 %v89, %v87
    %v120 = vpack.c.b16 %v90, %v88
    %v121 = vpack.c.b16 %v93, %v91
    %v122 = vpack.c.b16 %v94, %v92
    %v123 = vpack.c.b16 %v97, %v95
    %v124 = vpack.c.b16 %v98, %v96
    %v125 = vpack.c.b16 %v101, %v99
    %v126 = vpack.c.b16 %v102, %v100
    %v127 = vpack.c.b16 %v105, %v103
    %v128 = vpack.c.b16 %v106, %v104
    %v129 = vpack.c.b16 %v109, %v107
    %v130 = vpack.c.b16 %v110, %v108
    %v131 = vpack.c.b16 %v113, %v111
    %v132 = vpack.c.b16 %v114, %v112
    %v133 = vpack.c.b16 %v117, %v115
    %v134 = vpack.c.b16 %v118, %v116
    %v183 = vunpack.c.l.b16 %v32
    %v184 = vunpack.c.l.b16 %v33
    %v185 = vunpack.c.l.b16 %v34
    %v186 = vunpack.c.l.b16 %v35
    %v187 = vunpack.c.l.b16 %v36
    %v188 = vunpack.c.l.b16 %v37
    %v189 = vunpack.c.l.b16 %v38
    %v190 = vunpack.c.l.b16 %v39
    %v191 = vunpack.c.l.b16 %v40
    %v192 = vunpack.c.l.b16 %v41
    %v193 = vunpack.c.l.b16 %v42
    %v194 = vunpack.c.l.b16 %v43
    %v195 = vunpack.c.l.b16 %v44
    %v196 = vunpack.c.l.b16 %v45
    %v197 = vunpack.c.l.b16 %v46
    %v198 = vunpack.c.l.b16 %v47
    %v199 = vunpack.c.l.b16 %v48
    %v200 = vunpack.c.l.b16 %v49
    %v201 = vunpack.c.l.b16 %v50
    %v202 = vunpack.c.l.b16 %v51
    %v203 = vunpack.c.l.b16 %v52
    %v204 = vunpack.c.l.b16 %v53
    %v205 = vunpack.c.l.b16 %v54
    %v206 = vunpack.c.l.b16 %v55
    %v207 = vunpack.c.l.b16 %v56
    %v208 = vunpack.c.l.b16 %v57
    %v209 = vunpack.c.l.b16 %v58
    %v210 = vunpack.c.l.b16 %v59
    %v211 = vunpack.c.l.b16 %v60
    %v212 = vunpack.c.l.b16 %v61
    %v213 = vunpack.c.l.b16 %v62
    %v214 = vunpack.c.l.b16 %v63
    %v215 = vpack.c.b16 %v184, %v183
    %v216 = vpack.c.b16 %v186, %v185
    %v217 = vpack.c.b16 %v188, %v187
    %v218 = vpack.c.b16 %v190, %v189
    %v219 = vpack.c.b16 %v192, %v191
    %v220 = vpack.c.b16 %v194, %v193
    %v221 = vpack.c.b16 %v196, %v195
    %v222 = vpack.c.b16 %v198, %v197
    %v223 = vpack.c.b16 %v200, %v199
    %v224 = vpack.c.b16 %v202, %v201
    %v225 = vpack.c.b16 %v204, %v203
    %v226 = vpack.c.b16 %v206, %v205
    %v227 = vpack.c.b16 %v208, %v207
    %v228 = vpack.c.b16 %v210, %v209
    %v229 = vpack.c.b16 %v212, %v211
    %v230 = vpack.c.b16 %v214, %v213
    %247 = vmatprep.subr.bf16.mxu0 0
    %248 = vmatpush1.bf16.msra.mxu0 %v222
    %249 = vmatprep.subr.bf16.mxu0 0
    %250 = vmatpush1.bf16.msra.mxu0 %v221
    %251 = vmatprep.subr.bf16.mxu0 0
    %252 = vmatpush1.bf16.msra.mxu0 %v220
    %253 = vmatprep.subr.bf16.mxu0 0
    %254 = vmatpush1.bf16.msra.mxu0 %v219
    %255 = vmatprep.subr.bf16.mxu0 0
    %256 = vmatpush1.bf16.msra.mxu0 %v218
    %257 = vmatprep.subr.bf16.mxu0 0
    %258 = vmatpush1.bf16.msra.mxu0 %v217
    %259 = vmatprep.subr.bf16.mxu0 0
    %260 = vmatpush1.bf16.msra.mxu0 %v216
    %261 = vmatprep.subr.bf16.mxu0 0
    %262 = vmatpush1.bf16.msra.mxu0 %v215
    %263 = vmatprep.subr.bf16.mxu0 0
    %264 = vmatpush2.bf16.msra.mxu0 %v230
    %265 = vmatprep.subr.bf16.mxu0 0
    %266 = vmatpush2.bf16.msra.mxu0 %v229
    %267 = vmatprep.subr.bf16.mxu0 0
    %268 = vmatpush2.bf16.msra.mxu0 %v228
    %269 = vmatprep.subr.bf16.mxu0 0
    %270 = vmatpush2.bf16.msra.mxu0 %v227
    %271 = vmatprep.subr.bf16.mxu0 0
    %272 = vmatpush2.bf16.msra.mxu0 %v226
    %273 = vmatprep.subr.bf16.mxu0 0
    %274 = vmatpush2.bf16.msra.mxu0 %v225
    %275 = vmatprep.subr.bf16.mxu0 0
    %276 = vmatpush2.bf16.msra.mxu0 %v224
    %277 = vmatprep.subr.bf16.mxu0 0
    %278 = vmatpush2.bf16.msra.mxu0 %v223
    %279 = vmatprep.mubr.bf16.mxu0 %v120
    %280 = vmatmul.mubr.bf16.gmra.mxu0 %v119
    %v281 = vpop.f32.mrf.mxu0
    %v282 = vadd.f32 %v69, %v281
    %v283 = vpop.f32.mrf.mxu0
    %v284 = vpop.f32.mrf.mxu0
    %v285 = vadd.f32 %v69, %v284
    %v286 = vpop.f32.mrf.mxu0
    %287 = vmatprep.mubr.bf16.mxu0 %v122
    %288 = vmatmul.mubr.bf16.gmra.mxu0 %v121
    %v289 = vpop.f32.mrf.mxu0
    %v290 = vadd.f32 %v69, %v289
    %v291 = vpop.f32.mrf.mxu0
    %v292 = vpop.f32.mrf.mxu0
    %v293 = vadd.f32 %v69, %v292
    %v294 = vpop.f32.mrf.mxu0
    %295 = vmatprep.mubr.bf16.mxu0 %v124
    %296 = vmatmul.mubr.bf16.gmra.mxu0 %v123
    %v297 = vpop.f32.mrf.mxu0
    %v298 = vadd.f32 %v69, %v297
    %v299 = vpop.f32.mrf.mxu0
    %v300 = vpop.f32.mrf.mxu0
    %v301 = vadd.f32 %v69, %v300
    %v302 = vpop.f32.mrf.mxu0
    %303 = vmatprep.mubr.bf16.mxu0 %v126
    %304 = vmatmul.mubr.bf16.gmra.mxu0 %v125
    %v305 = vpop.f32.mrf.mxu0
    %v306 = vadd.f32 %v69, %v305
    %v307 = vpop.f32.mrf.mxu0
    %v308 = vpop.f32.mrf.mxu0
    %v309 = vadd.f32 %v69, %v308
    %v310 = vpop.f32.mrf.mxu0
    %311 = vmatprep.mubr.bf16.mxu0 %v128
    %312 = vmatmul.mubr.bf16.gmra.mxu0 %v127
    %v313 = vpop.f32.mrf.mxu0
    %v314 = vadd.f32 %v69, %v313
    %v315 = vpop.f32.mrf.mxu0
    %v316 = vpop.f32.mrf.mxu0
    %v317 = vadd.f32 %v69, %v316
    %v318 = vpop.f32.mrf.mxu0
    %319 = vmatprep.mubr.bf16.mxu0 %v130
    %320 = vmatmul.mubr.bf16.gmra.mxu0 %v129
    %v321 = vpop.f32.mrf.mxu0
    %v322 = vadd.f32 %v69, %v321
    %v323 = vpop.f32.mrf.mxu0
    %v324 = vpop.f32.mrf.mxu0
    %v325 = vadd.f32 %v69, %v324
    %v326 = vpop.f32.mrf.mxu0
    %327 = vmatprep.mubr.bf16.mxu0 %v132
    %328 = vmatmul.mubr.bf16.gmra.mxu0 %v131
    %v329 = vpop.f32.mrf.mxu0
    %v330 = vadd.f32 %v69, %v329
    %v331 = vpop.f32.mrf.mxu0
    %v332 = vpop.f32.mrf.mxu0
    %v333 = vadd.f32 %v69, %v332
    %v334 = vpop.f32.mrf.mxu0
    %335 = vmatprep.mubr.bf16.mxu0 %v134
    %336 = vmatmul.mubr.bf16.gmra.mxu0 %v133
    %v337 = vpop.f32.mrf.mxu0
    %v338 = vadd.f32 %v69, %v337
    %v339 = vpop.f32.mrf.mxu0
    %v340 = vpop.f32.mrf.mxu0
    %v341 = vadd.f32 %v69, %v340
    %v342 = vpop.f32.mrf.mxu0
    %343 = vdwg.mxu0
    %344 = vst [vmem:[#allocation2] sm:$0xff] %v282
    %345 = vst [vmem:[#allocation2 + $0x8] sm:$0xff] %v285
    %346 = vst [vmem:[#allocation2 + $0x10] sm:$0xff] %v290
    %347 = vst [vmem:[#allocation2 + $0x18] sm:$0xff] %v293
    %348 = vst [vmem:[#allocation2 + $0x20] sm:$0xff] %v298
    %349 = vst [vmem:[#allocation2 + $0x28] sm:$0xff] %v301
    %350 = vst [vmem:[#allocation2 + $0x30] sm:$0xff] %v306
    %351 = vst [vmem:[#allocation2 + $0x38] sm:$0xff] %v309
    %352 = vst [vmem:[#allocation2 + $0x40] sm:$0xff] %v314
    %353 = vst [vmem:[#allocation2 + $0x48] sm:$0xff] %v317
    %354 = vst [vmem:[#allocation2 + $0x50] sm:$0xff] %v322
    %355 = vst [vmem:[#allocation2 + $0x58] sm:$0xff] %v325
    %356 = vst [vmem:[#allocation2 + $0x60] sm:$0xff] %v330
    %357 = vst [vmem:[#allocation2 + $0x68] sm:$0xff] %v333
    %358 = vst [vmem:[#allocation2 + $0x70] sm:$0xff] %v338
    %359 = vst [vmem:[#allocation2 + $0x78] sm:$0xff] %v341
    // Predicated region
    $region14: #{_lambda_.5} parent=1 // pred_check
      _
    $region15: #{_lambda_.5} parent=1 // pred_check_branch
      %361 = sbr.rel (0) target = $region17
    $region16: #{_lambda_.5} parent=1 // pred_region
      %s363 = ssub.s32 2048, 2048
      %364 = vsyncadd [#allocation3], %s363
      %s365 = sshll.u32 [#allocation2], 4
      %s366 = int_to_ptr.vmem [resolvable:$true] %s365
      %371 = dma.vmem_to_hbm [thread:$0]  %s366, 2048, %s3, [#allocation3], 128, 128, 8
    $region17: #{_lambda_.5} parent=1 // pred_fallthru
      _
    // Predicated region
    $region18: #{_lambda_.5} parent=1 // pred_check
      _
    $region19: #{_lambda_.5} parent=1 // pred_check_branch
      %373 = sbr.rel (0) target = $region21
    $region20: #{_lambda_.5} parent=1 // pred_region
      %374 = dma.done [#allocation3], 2048
    $region21: #{_lambda_.5} parent=1 // pred_fallthru
      _
    %375 = vsyncpa [#allocation3], 1

// kernel: _lambda_.4
$region0: #{_lambda_.4}
  #allocation0 [shape = 'u32[]', space=smem, size = 0x4, offset = 0x4, fixed_abs, tag = 'smem constant byte address 0x4 - core index']
  #allocation1 [shape = 'u32[144,128]{1,0:T(1,128)}', space=vmem, size = 0x12000, scoped, tag = 'internal scratch']
  #allocation2 [shape = 'f32[10,10,256]{2,1,0:T(8,128)}', space=vmem, size = 0x28000, scoped, tag = 'scratch operand']
  %s0 = inlined_call_operand.vmem [shape: bf16[2,8,8,256], index: 0, kind: input, shape index: {}]
  %s1 = inlined_call_operand.vmem [shape: f32[9,256], index: 1, kind: input, shape index: {}]
  %s2 = inlined_call_operand.vmem [shape: f32[1,256], index: 2, kind: input, shape index: {}]
  %s3 = inlined_call_operand.vmem [shape: bf16[2,8,8,256], index: 3, kind: output, shape index: {}]
  %s4 = sld [smem:[#allocation0]]
  $region45: #{_lambda_.4} parent=0
    _
  %s6 = ssub.s32 1, %s4
  %s7 = scalar_select 0, %s6, %s4
  loop: start=0, step=1, limit=4
  $region2: #{_lambda_.4} parent=0 // loop_pre_header
    _
  $region3: #{_lambda_.4} parent=0 // loop_header
    %s9 = sphi 0, %s13
    %p10 = scmp.ge.s32.totalorder %s9, 4
    %s16 = sphi 0, %s28
    %s17 = sphi 0, %s24
    %s18 = sphi 0, %s16
    %s19 = sphi 0, %s17
    %s20 = sphi 0, %s18
    %s21 = sphi 0, %s19
    %s33 = sphi 0, %s35
    %s36 = sphi 0, %s33
    %s37 = sphi 0, %s36
    %s53 = sphi 0, %s37
    %s59 = sphi 0, %s61
    %s62 = sphi 0, %s59
    %s63 = sphi 0, %s62
    %s79 = sphi 0, %s63
    %s85 = sphi 0, %s87
    %s88 = sphi 0, %s85
    %s89 = sphi 0, %s88
    %s105 = sphi 0, %s89
    %s113 = sphi 0, %s115
    %s116 = sphi 0, %s113
    %s117 = sphi 0, %s116
    %s133 = sphi 0, %s117
  $region4: #{_lambda_.4} parent=0 // loop_header_branch
    %12 = sbr.rel (%p10) target = $region8
  $region5: #{_lambda_.4} parent=0 // loop_body
    %s14 = ssub.s32 %s9, 1
    %s15 = ssub.s32 %s9, 2
    %s22 = sadd.s32 1, %s17
    %p23 = scmp.ge.s32.totalorder %s22, 1
    %s24 = scalar_select %p23, 0, %s22
    %s25 = sadd.s32 1, %s16
    %s26 = scalar_select %p23, %s25, %s16
    %p27 = scmp.ge.s32.totalorder %s26, 2
    %s28 = scalar_select %p27, 0, %s26
    %s29 = ssub.s32 %s16, %s28
    %s30 = ssub.s32 %s17, %s24
    %s31 = sor.u32 %s29, %s30
    %p32 = scmp.eq.s32.totalorder %s31, 0
    %s34 = sadd.s32 %s33, 1
    %s35 = scalar_select %p32, %s33, %s34
    %p38 = pneg %p32
    %p39 = scmp.eq.s32.totalorder %s9, 1
    %p40 = por %p38, %p39
    %p41 = scmp.ne.s32.totalorder %s33, %s36
    %p42 = scmp.eq.s32.totalorder %s9, 0
    %p43 = por %p41, %p42
    %p44 = scmp.ne.s32.totalorder %s33, %s36
    %p45 = scmp.eq.s32.totalorder %s14, 1
    %p46 = por %p44, %p45
    %p47 = scmp.ne.s32.totalorder %s36, %s37
    %p48 = scmp.eq.s32.totalorder %s14, 0
    %p49 = por %p47, %p48
    %p50 = scmp.ne.s32.totalorder %s36, %s37
    %p51 = scmp.eq.s32.totalorder %s15, 1
    %p52 = por %p50, %p51
    %p54 = scmp.ne.s32.totalorder %s37, %s53
    %p55 = scmp.eq.s32.totalorder %s15, 0
    %p56 = por %p54, %p55
    %s57 = ssub.s32 %s17, %s24
    %p58 = scmp.eq.s32.totalorder %s57, 0
    %s60 = sadd.s32 %s59, 1
    %s61 = scalar_select %p58, %s59, %s60
    %p64 = pneg %p58
    %p65 = scmp.eq.s32.totalorder %s9, 1
    %p66 = por %p64, %p65
    %p67 = scmp.ne.s32.totalorder %s59, %s62
    %p68 = scmp.eq.s32.totalorder %s9, 0
    %p69 = por %p67, %p68
    %p70 = scmp.ne.s32.totalorder %s59, %s62
    %p71 = scmp.eq.s32.totalorder %s14, 1
    %p72 = por %p70, %p71
    %p73 = scmp.ne.s32.totalorder %s62, %s63
    %p74 = scmp.eq.s32.totalorder %s14, 0
    %p75 = por %p73, %p74
    %p76 = scmp.ne.s32.totalorder %s62, %s63
    %p77 = scmp.eq.s32.totalorder %s15, 1
    %p78 = por %p76, %p77
    %p80 = scmp.ne.s32.totalorder %s63, %s79
    %p81 = scmp.eq.s32.totalorder %s15, 0
    %p82 = por %p80, %p81
    %s83 = ssub.s32 %s17, %s24
    %p84 = scmp.eq.s32.totalorder %s83, 0
    %s86 = sadd.s32 %s85, 1
    %s87 = scalar_select %p84, %s85, %s86
    %p90 = pneg %p84
    %p91 = scmp.eq.s32.totalorder %s9, 1
    %p92 = por %p90, %p91
    %p93 = scmp.ne.s32.totalorder %s85, %s88
    %p94 = scmp.eq.s32.totalorder %s9, 0
    %p95 = por %p93, %p94
    %p96 = scmp.ne.s32.totalorder %s85, %s88
    %p97 = scmp.eq.s32.totalorder %s14, 1
    %p98 = por %p96, %p97
    %p99 = scmp.ne.s32.totalorder %s88, %s89
    %p100 = scmp.eq.s32.totalorder %s14, 0
    %p101 = por %p99, %p100
    %p102 = scmp.ne.s32.totalorder %s88, %s89
    %p103 = scmp.eq.s32.totalorder %s15, 1
    %p104 = por %p102, %p103
    %p106 = scmp.ne.s32.totalorder %s89, %s105
    %p107 = scmp.eq.s32.totalorder %s15, 0
    %p108 = por %p106, %p107
    %s109 = ssub.s32 %s16, %s28
    %s110 = ssub.s32 %s17, %s24
    %s111 = sor.u32 %s109, %s110
    %p112 = scmp.eq.s32.totalorder %s111, 0
    %s114 = sadd.s32 %s113, 1
    %s115 = scalar_select %p112, %s113, %s114
    %p118 = pneg %p112
    %p119 = scmp.eq.s32.totalorder %s9, 1
    %p120 = por %p118, %p119
    %p121 = scmp.ne.s32.totalorder %s113, %s116
    %p122 = scmp.eq.s32.totalorder %s9, 0
    %p123 = por %p121, %p122
    %p124 = scmp.ne.s32.totalorder %s113, %s116
    %p125 = scmp.eq.s32.totalorder %s14, 1
    %p126 = por %p124, %p125
    %p127 = scmp.ne.s32.totalorder %s116, %s117
    %p128 = scmp.eq.s32.totalorder %s14, 0
    %p129 = por %p127, %p128
    %p130 = scmp.ne.s32.totalorder %s116, %s117
    %p131 = scmp.eq.s32.totalorder %s15, 1
    %p132 = por %p130, %p131
    %p134 = scmp.ne.s32.totalorder %s117, %s133
    %p135 = scmp.eq.s32.totalorder %s15, 0
    %p136 = por %p134, %p135
    %p137 = scmp.le.s32.totalorder 1, %s9
    %p138 = scmp.lt.s32.totalorder %s9, 3
    %p139 = pnand %p137, %p138
    %p140 = pneg %p139
    // Predicated region
    $region9: #{_lambda_.4} parent=5 // pred_check
      _
    $region10: #{_lambda_.4} parent=5 // pred_check_branch
      %142 = sbr.rel (%p139) target = $region12
    $region11: #{_lambda_.4} parent=5 // pred_region
      %s143 = ssub.s32 %s9, 1
      // Predicated region
      $region13: #{_lambda_.4} parent=11 // pred_check
        %p144 = pneg %p75
      $region14: #{_lambda_.4} parent=11 // pred_check_branch
        %146 = sbr.rel (%p144) target = $region16
      $region15: #{_lambda_.4} parent=11 // pred_region
        %s147 = smul.u32 2, %s19
        %p148 = scmp.lt.s32.totalorder %s147, 1
        %s149 = scalar_select %p148, %s147, 1
        %s150 = smul.addr %s149, 8
        %s151 = scalar_lea.vmem %s1, %s150
        %s152 = smul.u32 2, %s19
      $region16: #{_lambda_.4} parent=11 // pred_fallthru
        _
      // Predicated region
      $region17: #{_lambda_.4} parent=11 // pred_check
        %p153 = pneg %p101
      $region18: #{_lambda_.4} parent=11 // pred_check_branch
        %155 = sbr.rel (%p153) target = $region20
      $region19: #{_lambda_.4} parent=11 // pred_region
        %s156 = smul.u32 2, %s19
        %p157 = scmp.lt.s32.totalorder %s156, 1
        %s158 = scalar_select %p157, %s156, 1
        %s159 = scalar_lea.vmem %s2, %s158
        %s160 = smul.u32 2, %s19
      $region20: #{_lambda_.4} parent=11 // pred_fallthru
        _
    $region12: #{_lambda_.4} parent=5 // pred_fallthru
      _
    %p161 = scmp.lt.s32.totalorder %s9, 2
    // Predicated region
    $region21: #{_lambda_.4} parent=5 // pred_check
      %p162 = pneg %p161
    $region22: #{_lambda_.4} parent=5 // pred_check_branch
      %164 = sbr.rel (%p162) target = $region24
    $region23: #{_lambda_.4} parent=5 // pred_region
      // Predicated region
      $region25: #{_lambda_.4} parent=23 // pred_check
        %p165 = pneg %p43
      $region26: #{_lambda_.4} parent=23 // pred_check_branch
        %167 = sbr.rel (%p165) target = $region28
      $region27: #{_lambda_.4} parent=23 // pred_region
        %s168 = smul.u32 2, %s17
        %p169 = scmp.lt.s32.totalorder %s16, 1
        %s170 = scalar_select %p169, %s16, 1
        %p171 = scmp.lt.s32.totalorder %s168, 1
        %s172 = scalar_select %p171, %s168, 1
        %s173 = smul.addr %s170, 16
        %s174 = sadd.s32 %s172, %s173
        %s175 = smul.addr %s174, 4
        %s176 = scalar_lea.vmem %s0, %s175
        %s177 = smul.u32 2, %s17
      $region28: #{_lambda_.4} parent=23 // pred_fallthru
        _
    $region24: #{_lambda_.4} parent=5 // pred_fallthru
      _
    %p178 = scmp.le.s32.totalorder 1, %s9
    %p179 = scmp.lt.s32.totalorder %s9, 3
    %p180 = pnand %p178, %p179
    %p181 = pneg %p180
    // Predicated region
    $region29: #{_lambda_.4} parent=5 // pred_check
      _
    $region30: #{_lambda_.4} parent=5 // pred_check_branch
      %183 = sbr.rel (%p180) target = $region32
    $region31: #{_lambda_.4} parent=5 // pred_region
      %s184 = ssub.s32 %s9, 1
      %s185 = smul.u32 2, %s19
      %p186 = scmp.lt.s32.totalorder %s18, 1
      %s187 = scalar_select %p186, %s18, 1
      %p188 = scmp.lt.s32.totalorder %s185, 1
      %s189 = scalar_select %p188, %s185, 1
      %s190 = smul.addr %s187, 16
      %s191 = sadd.s32 %s189, %s190
      %s192 = smul.addr %s191, 4
      %s193 = scalar_lea.vmem %s0, %s192
      %p194 = pneg %p49
      %p195 = pneg %p46
      %s196 = smul.u32 2, %s19
      %p197 = scmp.lt.s32.totalorder %s196, 1
      %s198 = scalar_select %p197, %s196, 1
      %s199 = smul.addr %s198, 8
      %s200 = scalar_lea.vmem %s1, %s199
      %p201 = pneg %p75
      %p202 = pneg %p72
      %s203 = smul.u32 2, %s19
      %p204 = scmp.lt.s32.totalorder %s203, 1
      %s205 = scalar_select %p204, %s203, 1
      %s206 = scalar_lea.vmem %s2, %s205
      %p207 = pneg %p101
      %p208 = pneg %p98
      %p209 = pneg %p129
      %p210 = pneg %p126
      %s211 = smul.u32 2, %s19
      %p212 = scmp.lt.s32.totalorder %s18, 1
      %s213 = scalar_select %p212, %s18, 1
      %p214 = scmp.lt.s32.totalorder %s211, 1
      %s215 = scalar_select %p214, %s211, 1
      %s216 = smul.addr %s213, 16
      %s217 = sadd.s32 %s215, %s216
      %s218 = smul.addr %s217, 4
      %s219 = scalar_lea.vmem %s3, %s218
      %s220 = smul.u32 2, %s19
      %p221 = scmp.lt.s32.totalorder %s18, 1
      %s222 = scalar_select %p221, %s18, 1
      %p223 = scmp.lt.s32.totalorder %s220, 1
      %s224 = scalar_select %p223, %s220, 1
      %s225 = smul.addr %s222, 16
      %s226 = sadd.s32 %s224, %s225
      %s227 = smul.addr %s226, 4
      %s228 = scalar_lea.vmem %s0, %s227
      %s229 = smul.u32 2, %s19
      %s230 = smul.u32 2, %s19
      %p231 = scmp.lt.s32.totalorder %s230, 1
      %s232 = scalar_select %p231, %s230, 1
      %s233 = smul.addr %s232, 8
      %s234 = scalar_lea.vmem %s1, %s233
      %s235 = smul.u32 2, %s19
      %s236 = smul.u32 2, %s19
      %p237 = scmp.lt.s32.totalorder %s236, 1
      %s238 = scalar_select %p237, %s236, 1
      %s239 = scalar_lea.vmem %s2, %s238
      %s240 = smul.u32 2, %s19
      %s241 = smul.u32 2, %s19
      %p242 = scmp.lt.s32.totalorder %s18, 1
      %s243 = scalar_select %p242, %s18, 1
      %p244 = scmp.lt.s32.totalorder %s241, 1
      %s245 = scalar_select %p244, %s241, 1
      %s246 = smul.addr %s243, 16
      %s247 = sadd.s32 %s245, %s246
      %s248 = smul.addr %s247, 4
      %s249 = scalar_lea.vmem %s3, %s248
      %s250 = smul.u32 2, %s19
      %251 = vst [vmem:[#allocation2] sm:$0xff] 0.0
      %252 = vst [vmem:[#allocation2 + $0x8] sm:$0xff] 0.0
      %253 = vst [vmem:[#allocation2 + $0x10] sm:$0x3] 0.0
      %254 = vst [vmem:[#allocation2 + $0x18] sm:$0x3] 0.0
      %255 = vst [vmem:[#allocation2 + $0x20] sm:$0xff] 0.0
      %256 = vst [vmem:[#allocation2 + $0x28] sm:$0xff] 0.0
      %257 = vst [vmem:[#allocation2 + $0x30] sm:$0x3] 0.0
      %258 = vst [vmem:[#allocation2 + $0x38] sm:$0x3] 0.0
      %259 = vst [vmem:[#allocation2 + $0x40] sm:$0xff] 0.0
      %260 = vst [vmem:[#allocation2 + $0x48] sm:$0xff] 0.0
      %261 = vst [vmem:[#allocation2 + $0x50] sm:$0x3] 0.0
      %262 = vst [vmem:[#allocation2 + $0x58] sm:$0x3] 0.0
      %263 = vst [vmem:[#allocation2 + $0x60] sm:$0xff] 0.0
      %264 = vst [vmem:[#allocation2 + $0x68] sm:$0xff] 0.0
      %265 = vst [vmem:[#allocation2 + $0x70] sm:$0x3] 0.0
      %266 = vst [vmem:[#allocation2 + $0x78] sm:$0x3] 0.0
      %267 = vst [vmem:[#allocation2 + $0x80] sm:$0xff] 0.0
      %268 = vst [vmem:[#allocation2 + $0x88] sm:$0xff] 0.0
      %269 = vst [vmem:[#allocation2 + $0x90] sm:$0x3] 0.0
      %270 = vst [vmem:[#allocation2 + $0x98] sm:$0x3] 0.0
      %271 = vst [vmem:[#allocation2 + $0xa0] sm:$0xff] 0.0
      %272 = vst [vmem:[#allocation2 + $0xa8] sm:$0xff] 0.0
      %273 = vst [vmem:[#allocation2 + $0xb0] sm:$0x3] 0.0
      %274 = vst [vmem:[#allocation2 + $0xb8] sm:$0x3] 0.0
      %275 = vst [vmem:[#allocation2 + $0xc0] sm:$0xff] 0.0
      %276 = vst [vmem:[#allocation2 + $0xc8] sm:$0xff] 0.0
      %277 = vst [vmem:[#allocation2 + $0xd0] sm:$0x3] 0.0
      %278 = vst [vmem:[#allocation2 + $0xd8] sm:$0x3] 0.0
      %279 = vst [vmem:[#allocation2 + $0xe0] sm:$0xff] 0.0
      %280 = vst [vmem:[#allocation2 + $0xe8] sm:$0xff] 0.0
      %281 = vst [vmem:[#allocation2 + $0xf0] sm:$0x3] 0.0
      %282 = vst [vmem:[#allocation2 + $0xf8] sm:$0x3] 0.0
      %283 = vst [vmem:[#allocation2 + $0x100] sm:$0xff] 0.0
      %284 = vst [vmem:[#allocation2 + $0x108] sm:$0xff] 0.0
      %285 = vst [vmem:[#allocation2 + $0x110] sm:$0x3] 0.0
      %286 = vst [vmem:[#allocation2 + $0x118] sm:$0x3] 0.0
      %287 = vst [vmem:[#allocation2 + $0x120] sm:$0xff] 0.0
      %288 = vst [vmem:[#allocation2 + $0x128] sm:$0xff] 0.0
      %289 = vst [vmem:[#allocation2 + $0x130] sm:$0x3] 0.0
      %290 = vst [vmem:[#allocation2 + $0x138] sm:$0x3] 0.0
      %v291 = vld [vmem:[%s228] sm:$0xff]
      %v292 = vld [vmem:[%s228 + $0x8] sm:$0xff]
      %v293 = vld [vmem:[%s228 + $0x10] sm:$0xff]
      %v294 = vld [vmem:[%s228 + $0x18] sm:$0xff]
      %v295 = vld [vmem:[%s228 + $0x20] sm:$0xff]
      %v296 = vld [vmem:[%s228 + $0x28] sm:$0xff]
      %v297 = vld [vmem:[%s228 + $0x30] sm:$0xff]
      %v298 = vld [vmem:[%s228 + $0x38] sm:$0xff]
      %v299 = vunpack.c.l.bf16 %v291
      %v300 = vunpack.c.h.bf16 %v291
      %v301 = vunpack.c.l.bf16 %v292
      %v302 = vunpack.c.h.bf16 %v292
      %v303 = vunpack.c.l.bf16 %v293
      %v304 = vunpack.c.h.bf16 %v293
      %v305 = vunpack.c.l.bf16 %v294
      %v306 = vunpack.c.h.bf16 %v294
      %v307 = vunpack.c.l.bf16 %v295
      %v308 = vunpack.c.h.bf16 %v295
      %v309 = vunpack.c.l.bf16 %v296
      %v310 = vunpack.c.h.bf16 %v296
      %v311 = vunpack.c.l.bf16 %v297
      %v312 = vunpack.c.h.bf16 %v297
      %v313 = vunpack.c.l.bf16 %v298
      %v314 = vunpack.c.h.bf16 %v298
      %v331 = vrot.slane %v299, 7
      %v332 = vrot.slane %v300, 7
      %v333 = vrot.slane %v301, 7
      %v334 = vrot.slane %v302, 7
      %v335 = vrot.slane %v303, 7
      %v336 = vrot.slane %v304, 7
      %v337 = vrot.slane %v305, 7
      %v338 = vrot.slane %v306, 7
      %v339 = vrot.slane %v307, 7
      %v340 = vrot.slane %v308, 7
      %v341 = vrot.slane %v309, 7
      %v342 = vrot.slane %v310, 7
      %v343 = vrot.slane %v311, 7
      %v344 = vrot.slane %v312, 7
      %v345 = vrot.slane %v313, 7
      %v346 = vrot.slane %v314, 7
      %s363 = scalar_lea.vmem [#allocation2], 32
      %364 = vst [vmem:[%s363] sm:$0xfe] %v331
      %365 = vst [vmem:[%s363 + $0x8] sm:$0xfe] %v332
      %366 = vst [vmem:[%s363 + $0x10] sm:$0x1] %v331
      %367 = vst [vmem:[%s363 + $0x18] sm:$0x1] %v332
      %368 = vst [vmem:[%s363 + $0x20] sm:$0xfe] %v333
      %369 = vst [vmem:[%s363 + $0x28] sm:$0xfe] %v334
      %370 = vst [vmem:[%s363 + $0x30] sm:$0x1] %v333
      %371 = vst [vmem:[%s363 + $0x38] sm:$0x1] %v334
      %372 = vst [vmem:[%s363 + $0x40] sm:$0xfe] %v335
      %373 = vst [vmem:[%s363 + $0x48] sm:$0xfe] %v336
      %374 = vst [vmem:[%s363 + $0x50] sm:$0x1] %v335
      %375 = vst [vmem:[%s363 + $0x58] sm:$0x1] %v336
      %376 = vst [vmem:[%s363 + $0x60] sm:$0xfe] %v337
      %377 = vst [vmem:[%s363 + $0x68] sm:$0xfe] %v338
      %378 = vst [vmem:[%s363 + $0x70] sm:$0x1] %v337
      %379 = vst [vmem:[%s363 + $0x78] sm:$0x1] %v338
      %380 = vst [vmem:[%s363 + $0x80] sm:$0xfe] %v339
      %381 = vst [vmem:[%s363 + $0x88] sm:$0xfe] %v340
      %382 = vst [vmem:[%s363 + $0x90] sm:$0x1] %v339
      %383 = vst [vmem:[%s363 + $0x98] sm:$0x1] %v340
      %384 = vst [vmem:[%s363 + $0xa0] sm:$0xfe] %v341
      %385 = vst [vmem:[%s363 + $0xa8] sm:$0xfe] %v342
      %386 = vst [vmem:[%s363 + $0xb0] sm:$0x1] %v341
      %387 = vst [vmem:[%s363 + $0xb8] sm:$0x1] %v342
      %388 = vst [vmem:[%s363 + $0xc0] sm:$0xfe] %v343
      %389 = vst [vmem:[%s363 + $0xc8] sm:$0xfe] %v344
      %390 = vst [vmem:[%s363 + $0xd0] sm:$0x1] %v343
      %391 = vst [vmem:[%s363 + $0xd8] sm:$0x1] %v344
      %392 = vst [vmem:[%s363 + $0xe0] sm:$0xfe] %v345
      %393 = vst [vmem:[%s363 + $0xe8] sm:$0xfe] %v346
      %394 = vst [vmem:[%s363 + $0xf0] sm:$0x1] %v345
      %395 = vst [vmem:[%s363 + $0xf8] sm:$0x1] %v346
      %v396 = vld [vmem:[%s234] sm:$0xff]
      %v397 = vld [vmem:[%s234 + $0x8] sm:$0xff]
      %v398 = vld [vmem:[%s234 + $0x10] sm:$0x1]
      %v399 = vld [vmem:[%s234 + $0x18] sm:$0x1]
      %v400 = vld [vmem:[%s239] sm:$0x3]
      %v401 = vld [vmem:[#allocation2] sm:$0xff]
      %v402 = vld [vmem:[#allocation2 + $0x8] sm:$0xff]
      %v403 = vld [vmem:[#allocation2 + $0x20] sm:$0xff]
      %v404 = vld [vmem:[#allocation2 + $0x28] sm:$0xff]
      %v405 = vld [vmem:[#allocation2 + $0x40] sm:$0xff]
      %v406 = vld [vmem:[#allocation2 + $0x48] sm:$0xff]
      %v407 = vld [vmem:[#allocation2 + $0x60] sm:$0xff]
      %v408 = vld [vmem:[#allocation2 + $0x68] sm:$0xff]
      %v409 = vld [vmem:[#allocation2 + $0x80] sm:$0xff]
      %v410 = vld [vmem:[#allocation2 + $0x88] sm:$0xff]
      %v411 = vld [vmem:[#allocation2 + $0xa0] sm:$0xff]
      %v412 = vld [vmem:[#allocation2 + $0xa8] sm:$0xff]
      %v413 = vld [vmem:[#allocation2 + $0xc0] sm:$0xff]
      %v414 = vld [vmem:[#allocation2 + $0xc8] sm:$0xff]
      %v415 = vld [vmem:[#allocation2 + $0xe0] sm:$0xff]
      %v416 = vld [vmem:[#allocation2 + $0xe8] sm:$0xff]
      %v417 = vld [vmem:[#allocation2 + $0x100] sm:$0xff]
      %v418 = vld [vmem:[#allocation2 + $0x108] sm:$0xff]
      %v419 = vld [vmem:[#allocation2 + $0x120] sm:$0xff]
      %v420 = vld [vmem:[#allocation2 + $0x128] sm:$0xff]
      %v421 = vld [vmem:[#allocation2] sm:$0xfe]
      %v422 = vld [vmem:[#allocation2 + $0x8] sm:$0xfe]
      %v423 = vld [vmem:[#allocation2 + $0x10] sm:$0x1]
      %v424 = vld [vmem:[#allocation2 + $0x18] sm:$0x1]
      %v425 = vld [vmem:[#allocation2 + $0x20] sm:$0xfe]
      %v426 = vld [vmem:[#allocation2 + $0x28] sm:$0xfe]
      %v427 = vld [vmem:[#allocation2 + $0x30] sm:$0x1]
      %v428 = vld [vmem:[#allocation2 + $0x38] sm:$0x1]
      %v429 = vld [vmem:[#allocation2 + $0x40] sm:$0xfe]
      %v430 = vld [vmem:[#allocation2 + $0x48] sm:$0xfe]
      %v431 = vld [vmem:[#allocation2 + $0x50] sm:$0x1]
      %v432 = vld [vmem:[#allocation2 + $0x58] sm:$0x1]
      %v433 = vld [vmem:[#allocation2 + $0x60] sm:$0xfe]
      %v434 = vld [vmem:[#allocation2 + $0x68] sm:$0xfe]
      %v435 = vld [vmem:[#allocation2 + $0x70] sm:$0x1]
      %v436 = vld [vmem:[#allocation2 + $0x78] sm:$0x1]
      %v437 = vld [vmem:[#allocation2 + $0x80] sm:$0xfe]
      %v438 = vld [vmem:[#allocation2 + $0x88] sm:$0xfe]
      %v439 = vld [vmem:[#allocation2 + $0x90] sm:$0x1]
      %v440 = vld [vmem:[#allocation2 + $0x98] sm:$0x1]
      %v441 = vld [vmem:[#allocation2 + $0xa0] sm:$0xfe]
      %v442 = vld [vmem:[#allocation2 + $0xa8] sm:$0xfe]
      %v443 = vld [vmem:[#allocation2 + $0xb0] sm:$0x1]
      %v444 = vld [vmem:[#allocation2 + $0xb8] sm:$0x1]
      %v445 = vld [vmem:[#allocation2 + $0xc0] sm:$0xfe]
      %v446 = vld [vmem:[#allocation2 + $0xc8] sm:$0xfe]
      %v447 = vld [vmem:[#allocation2 + $0xd0] sm:$0x1]
      %v448 = vld [vmem:[#allocation2 + $0xd8] sm:$0x1]
      %v449 = vld [vmem:[#allocation2 + $0xe0] sm:$0xfe]
      %v450 = vld [vmem:[#allocation2 + $0xe8] sm:$0xfe]
      %v451 = vld [vmem:[#allocation2 + $0xf0] sm:$0x1]
      %v452 = vld [vmem:[#allocation2 + $0xf8] sm:$0x1]
      %v453 = vld [vmem:[#allocation2 + $0x100] sm:$0xfe]
      %v454 = vld [vmem:[#allocation2 + $0x108] sm:$0xfe]
      %v455 = vld [vmem:[#allocation2 + $0x110] sm:$0x1]
      %v456 = vld [vmem:[#allocation2 + $0x118] sm:$0x1]
      %v457 = vld [vmem:[#allocation2 + $0x120] sm:$0xfe]
      %v458 = vld [vmem:[#allocation2 + $0x128] sm:$0xfe]
      %v459 = vld [vmem:[#allocation2 + $0x130] sm:$0x1]
      %v460 = vld [vmem:[#allocation2 + $0x138] sm:$0x1]
      %v461 = vld [vmem:[#allocation2] sm:$0xfc]
      %v462 = vld [vmem:[#allocation2 + $0x8] sm:$0xfc]
      %v463 = vld [vmem:[#allocation2 + $0x10] sm:$0x3]
      %v464 = vld [vmem:[#allocation2 + $0x18] sm:$0x3]
      %v465 = vld [vmem:[#allocation2 + $0x20] sm:$0xfc]
      %v466 = vld [vmem:[#allocation2 + $0x28] sm:$0xfc]
      %v467 = vld [vmem:[#allocation2 + $0x30] sm:$0x3]
      %v468 = vld [vmem:[#allocation2 + $0x38] sm:$0x3]
      %v469 = vld [vmem:[#allocation2 + $0x40] sm:$0xfc]
      %v470 = vld [vmem:[#allocation2 + $0x48] sm:$0xfc]
      %v471 = vld [vmem:[#allocation2 + $0x50] sm:$0x3]
      %v472 = vld [vmem:[#allocation2 + $0x58] sm:$0x3]
      %v473 = vld [vmem:[#allocation2 + $0x60] sm:$0xfc]
      %v474 = vld [vmem:[#allocation2 + $0x68] sm:$0xfc]
      %v475 = vld [vmem:[#allocation2 + $0x70] sm:$0x3]
      %v476 = vld [vmem:[#allocation2 + $0x78] sm:$0x3]
      %v477 = vld [vmem:[#allocation2 + $0x80] sm:$0xfc]
      %v478 = vld [vmem:[#allocation2 + $0x88] sm:$0xfc]
      %v479 = vld [vmem:[#allocation2 + $0x90] sm:$0x3]
      %v480 = vld [vmem:[#allocation2 + $0x98] sm:$0x3]
      %v481 = vld [vmem:[#allocation2 + $0xa0] sm:$0xfc]
      %v482 = vld [vmem:[#allocation2 + $0xa8] sm:$0xfc]
      %v483 = vld [vmem:[#allocation2 + $0xb0] sm:$0x3]
      %v484 = vld [vmem:[#allocation2 + $0xb8] sm:$0x3]
      %v485 = vld [vmem:[#allocation2 + $0xc0] sm:$0xfc]
      %v486 = vld [vmem:[#allocation2 + $0xc8] sm:$0xfc]
      %v487 = vld [vmem:[#allocation2 + $0xd0] sm:$0x3]
      %v488 = vld [vmem:[#allocation2 + $0xd8] sm:$0x3]
      %v489 = vld [vmem:[#allocation2 + $0xe0] sm:$0xfc]
      %v490 = vld [vmem:[#allocation2 + $0xe8] sm:$0xfc]
      %v491 = vld [vmem:[#allocation2 + $0xf0] sm:$0x3]
      %v492 = vld [vmem:[#allocation2 + $0xf8] sm:$0x3]
      %v493 = vld [vmem:[#allocation2 + $0x100] sm:$0xfc]
      %v494 = vld [vmem:[#allocation2 + $0x108] sm:$0xfc]
      %v495 = vld [vmem:[#allocation2 + $0x110] sm:$0x3]
      %v496 = vld [vmem:[#allocation2 + $0x118] sm:$0x3]
      %v497 = vld [vmem:[#allocation2 + $0x120] sm:$0xfc]
      %v498 = vld [vmem:[#allocation2 + $0x128] sm:$0xfc]
      %v499 = vld [vmem:[#allocation2 + $0x130] sm:$0x3]
      %v500 = vld [vmem:[#allocation2 + $0x138] sm:$0x3]
      %v501 = vlaneseq
      %v502 = vshrl.u32 %v501, 7
      %v503 = vsub.s32 0, %v502
      %v504 = vrot.slane %v396, %v503
      %v505 = vlaneseq
      %v506 = vshrl.u32 %v505, 7
      %v507 = vsub.s32 0, %v506
      %v508 = vrot.slane %v397, %v507
      %v509 = vmul.f32 %v401, %v504
      %v510 = vmul.f32 %v402, %v508
      %v511 = vmul.f32 %v403, %v504
      %v512 = vmul.f32 %v404, %v508
      %v513 = vmul.f32 %v405, %v504
      %v514 = vmul.f32 %v406, %v508
      %v515 = vmul.f32 %v407, %v504
      %v516 = vmul.f32 %v408, %v508
      %v517 = vmul.f32 %v409, %v504
      %v518 = vmul.f32 %v410, %v508
      %v519 = vmul.f32 %v411, %v504
      %v520 = vmul.f32 %v412, %v508
      %v521 = vmul.f32 %v413, %v504
      %v522 = vmul.f32 %v414, %v508
      %v523 = vmul.f32 %v415, %v504
      %v524 = vmul.f32 %v416, %v508
      %v525 = vadd.f32 %v509, 0.0
      %v526 = vadd.f32 %v510, 0.0
      %v527 = vadd.f32 %v511, 0.0
      %v528 = vadd.f32 %v512, 0.0
      %v529 = vadd.f32 %v513, 0.0
      %v530 = vadd.f32 %v514, 0.0
      %v531 = vadd.f32 %v515, 0.0
      %v532 = vadd.f32 %v516, 0.0
      %v533 = vadd.f32 %v517, 0.0
      %v534 = vadd.f32 %v518, 0.0
      %v535 = vadd.f32 %v519, 0.0
      %v536 = vadd.f32 %v520, 0.0
      %v537 = vadd.f32 %v521, 0.0
      %v538 = vadd.f32 %v522, 0.0
      %v539 = vadd.f32 %v523, 0.0
      %v540 = vadd.f32 %v524, 0.0
      %v541 = vlaneseq
      %v542 = vshrl.u32 %v541, 7
      %v543 = vsub.s32 1, %v542
      %v544 = vrot.slane %v396, %v543
      %v545 = vlaneseq
      %v546 = vshrl.u32 %v545, 7
      %v547 = vsub.s32 1, %v546
      %v548 = vrot.slane %v397, %v547
      %v549 = vmul.f32 %v421, %v544
      %v550 = vmul.f32 %v422, %v548
      %v551 = vmul.f32 %v423, %v544
      %v552 = vmul.f32 %v424, %v548
      %v553 = vmul.f32 %v425, %v544
      %v554 = vmul.f32 %v426, %v548
      %v555 = vmul.f32 %v427, %v544
      %v556 = vmul.f32 %v428, %v548
      %v557 = vmul.f32 %v429, %v544
      %v558 = vmul.f32 %v430, %v548
      %v559 = vmul.f32 %v431, %v544
      %v560 = vmul.f32 %v432, %v548
      %v561 = vmul.f32 %v433, %v544
      %v562 = vmul.f32 %v434, %v548
      %v563 = vmul.f32 %v435, %v544
      %v564 = vmul.f32 %v436, %v548
      %v565 = vmul.f32 %v437, %v544
      %v566 = vmul.f32 %v438, %v548
      %v567 = vmul.f32 %v439, %v544
      %v568 = vmul.f32 %v440, %v548
      %v569 = vmul.f32 %v441, %v544
      %v570 = vmul.f32 %v442, %v548
      %v571 = vmul.f32 %v443, %v544
      %v572 = vmul.f32 %v444, %v548
      %v573 = vmul.f32 %v445, %v544
      %v574 = vmul.f32 %v446, %v548
      %v575 = vmul.f32 %v447, %v544
      %v576 = vmul.f32 %v448, %v548
      %v577 = vmul.f32 %v449, %v544
      %v578 = vmul.f32 %v450, %v548
      %v579 = vmul.f32 %v451, %v544
      %v580 = vmul.f32 %v452, %v548
      %vm613 = vcmask 1046528
      %v614 = vrot.slane %v549, 1
      %v615 = vrot.slane %v551, 1
      %v616 = vsel %vm613, %v614, %v615
      %v617 = vrot.slane %v550, 1
      %v618 = vrot.slane %v552, 1
      %v619 = vsel %vm613, %v617, %v618
      %v620 = vrot.slane %v553, 1
      %v621 = vrot.slane %v555, 1
      %v622 = vsel %vm613, %v620, %v621
      %v623 = vrot.slane %v554, 1
      %v624 = vrot.slane %v556, 1
      %v625 = vsel %vm613, %v623, %v624
      %v626 = vrot.slane %v557, 1
      %v627 = vrot.slane %v559, 1
      %v628 = vsel %vm613, %v626, %v627
      %v629 = vrot.slane %v558, 1
      %v630 = vrot.slane %v560, 1
      %v631 = vsel %vm613, %v629, %v630
      %v632 = vrot.slane %v561, 1
      %v633 = vrot.slane %v563, 1
      %v634 = vsel %vm613, %v632, %v633
      %v635 = vrot.slane %v562, 1
      %v636 = vrot.slane %v564, 1
      %v637 = vsel %vm613, %v635, %v636
      %v638 = vrot.slane %v565, 1
      %v639 = vrot.slane %v567, 1
      %v640 = vsel %vm613, %v638, %v639
      %v641 = vrot.slane %v566, 1
      %v642 = vrot.slane %v568, 1
      %v643 = vsel %vm613, %v641, %v642
      %v644 = vrot.slane %v569, 1
      %v645 = vrot.slane %v571, 1
      %v646 = vsel %vm613, %v644, %v645
      %v647 = vrot.slane %v570, 1
      %v648 = vrot.slane %v572, 1
      %v649 = vsel %vm613, %v647, %v648
      %v650 = vrot.slane %v573, 1
      %v651 = vrot.slane %v575, 1
      %v652 = vsel %vm613, %v650, %v651
      %v653 = vrot.slane %v574, 1
      %v654 = vrot.slane %v576, 1
      %v655 = vsel %vm613, %v653, %v654
      %v656 = vrot.slane %v577, 1
      %v657 = vrot.slane %v579, 1
      %v658 = vsel %vm613, %v656, %v657
      %v659 = vrot.slane %v578, 1
      %v660 = vrot.slane %v580, 1
      %v661 = vsel %vm613, %v659, %v660
      %v678 = vadd.f32 %v525, %v616
      %v679 = vadd.f32 %v526, %v619
      %v680 = vadd.f32 %v527, %v622
      %v681 = vadd.f32 %v528, %v625
      %v682 = vadd.f32 %v529, %v628
      %v683 = vadd.f32 %v530, %v631
      %v684 = vadd.f32 %v531, %v634
      %v685 = vadd.f32 %v532, %v637
      %v686 = vadd.f32 %v533, %v640
      %v687 = vadd.f32 %v534, %v643
      %v688 = vadd.f32 %v535, %v646
      %v689 = vadd.f32 %v536, %v649
      %v690 = vadd.f32 %v537, %v652
      %v691 = vadd.f32 %v538, %v655
      %v692 = vadd.f32 %v539, %v658
      %v693 = vadd.f32 %v540, %v661
      %v694 = vlaneseq
      %v695 = vshrl.u32 %v694, 7
      %v696 = vsub.s32 2, %v695
      %v697 = vrot.slane %v396, %v696
      %v698 = vlaneseq
      %v699 = vshrl.u32 %v698, 7
      %v700 = vsub.s32 2, %v699
      %v701 = vrot.slane %v397, %v700
      %v702 = vmul.f32 %v461, %v697
      %v703 = vmul.f32 %v462, %v701
      %v704 = vmul.f32 %v463, %v697
      %v705 = vmul.f32 %v464, %v701
      %v706 = vmul.f32 %v465, %v697
      %v707 = vmul.f32 %v466, %v701
      %v708 = vmul.f32 %v467, %v697
      %v709 = vmul.f32 %v468, %v701
      %v710 = vmul.f32 %v469, %v697
      %v711 = vmul.f32 %v470, %v701
      %v712 = vmul.f32 %v471, %v697
      %v713 = vmul.f32 %v472, %v701
      %v714 = vmul.f32 %v473, %v697
      %v715 = vmul.f32 %v474, %v701
      %v716 = vmul.f32 %v475, %v697
      %v717 = vmul.f32 %v476, %v701
      %v718 = vmul.f32 %v477, %v697
      %v719 = vmul.f32 %v478, %v701
      %v720 = vmul.f32 %v479, %v697
      %v721 = vmul.f32 %v480, %v701
      %v722 = vmul.f32 %v481, %v697
      %v723 = vmul.f32 %v482, %v701
      %v724 = vmul.f32 %v483, %v697
      %v725 = vmul.f32 %v484, %v701
      %v726 = vmul.f32 %v485, %v697
      %v727 = vmul.f32 %v486, %v701
      %v728 = vmul.f32 %v487, %v697
      %v729 = vmul.f32 %v488, %v701
      %v730 = vmul.f32 %v489, %v697
      %v731 = vmul.f32 %v490, %v701
      %v732 = vmul.f32 %v491, %v697
      %v733 = vmul.f32 %v492, %v701
      %vm766 = vcmask 1045504
      %v767 = vrot.slane %v702, 2
      %v768 = vrot.slane %v704, 2
      %v769 = vsel %vm766, %v767, %v768
      %v770 = vrot.slane %v703, 2
      %v771 = vrot.slane %v705, 2
      %v772 = vsel %vm766, %v770, %v771
      %v773 = vrot.slane %v706, 2
      %v774 = vrot.slane %v708, 2
      %v775 = vsel %vm766, %v773, %v774
      %v776 = vrot.slane %v707, 2
      %v777 = vrot.slane %v709, 2
      %v778 = vsel %vm766, %v776, %v777
      %v779 = vrot.slane %v710, 2
      %v780 = vrot.slane %v712, 2
      %v781 = vsel %vm766, %v779, %v780
      %v782 = vrot.slane %v711, 2
      %v783 = vrot.slane %v713, 2
      %v784 = vsel %vm766, %v782, %v783
      %v785 = vrot.slane %v714, 2
      %v786 = vrot.slane %v716, 2
      %v787 = vsel %vm766, %v785, %v786
      %v788 = vrot.slane %v715, 2
      %v789 = vrot.slane %v717, 2
      %v790 = vsel %vm766, %v788, %v789
      %v791 = vrot.slane %v718, 2
      %v792 = vrot.slane %v720, 2
      %v793 = vsel %vm766, %v791, %v792
      %v794 = vrot.slane %v719, 2
      %v795 = vrot.slane %v721, 2
      %v796 = vsel %vm766, %v794, %v795
      %v797 = vrot.slane %v722, 2
      %v798 = vrot.slane %v724, 2
      %v799 = vsel %vm766, %v797, %v798
      %v800 = vrot.slane %v723, 2
      %v801 = vrot.slane %v725, 2
      %v802 = vsel %vm766, %v800, %v801
      %v803 = vrot.slane %v726, 2
      %v804 = vrot.slane %v728, 2
      %v805 = vsel %vm766, %v803, %v804
      %v806 = vrot.slane %v727, 2
      %v807 = vrot.slane %v729, 2
      %v808 = vsel %vm766, %v806, %v807
      %v809 = vrot.slane %v730, 2
      %v810 = vrot.slane %v732, 2
      %v811 = vsel %vm766, %v809, %v810
      %v812 = vrot.slane %v731, 2
      %v813 = vrot.slane %v733, 2
      %v814 = vsel %vm766, %v812, %v813
      %v831 = vadd.f32 %v678, %v769
      %v832 = vadd.f32 %v679, %v772
      %v833 = vadd.f32 %v680, %v775
      %v834 = vadd.f32 %v681, %v778
      %v835 = vadd.f32 %v682, %v781
      %v836 = vadd.f32 %v683, %v784
      %v837 = vadd.f32 %v684, %v787
      %v838 = vadd.f32 %v685, %v790
      %v839 = vadd.f32 %v686, %v793
      %v840 = vadd.f32 %v687, %v796
      %v841 = vadd.f32 %v688, %v799
      %v842 = vadd.f32 %v689, %v802
      %v843 = vadd.f32 %v690, %v805
      %v844 = vadd.f32 %v691, %v808
      %v845 = vadd.f32 %v692, %v811
      %v846 = vadd.f32 %v693, %v814
      %v847 = vlaneseq
      %v848 = vshrl.u32 %v847, 7
      %v849 = vsub.s32 3, %v848
      %v850 = vrot.slane %v396, %v849
      %v851 = vlaneseq
      %v852 = vshrl.u32 %v851, 7
      %v853 = vsub.s32 3, %v852
      %v854 = vrot.slane %v397, %v853
      %v855 = vmul.f32 %v403, %v850
      %v856 = vmul.f32 %v404, %v854
      %v857 = vmul.f32 %v405, %v850
      %v858 = vmul.f32 %v406, %v854
      %v859 = vmul.f32 %v407, %v850
      %v860 = vmul.f32 %v408, %v854
      %v861 = vmul.f32 %v409, %v850
      %v862 = vmul.f32 %v410, %v854
      %v863 = vmul.f32 %v411, %v850
      %v864 = vmul.f32 %v412, %v854
      %v865 = vmul.f32 %v413, %v850
      %v866 = vmul.f32 %v414, %v854
      %v867 = vmul.f32 %v415, %v850
      %v868 = vmul.f32 %v416, %v854
      %v869 = vmul.f32 %v417, %v850
      %v870 = vmul.f32 %v418, %v854
      %v871 = vadd.f32 %v831, %v855
      %v872 = vadd.f32 %v832, %v856
      %v873 = vadd.f32 %v833, %v857
      %v874 = vadd.f32 %v834, %v858
      %v875 = vadd.f32 %v835, %v859
      %v876 = vadd.f32 %v836, %v860
      %v877 = vadd.f32 %v837, %v861
      %v878 = vadd.f32 %v838, %v862
      %v879 = vadd.f32 %v839, %v863
      %v880 = vadd.f32 %v840, %v864
      %v881 = vadd.f32 %v841, %v865
      %v882 = vadd.f32 %v842, %v866
      %v883 = vadd.f32 %v843, %v867
      %v884 = vadd.f32 %v844, %v868
      %v885 = vadd.f32 %v845, %v869
      %v886 = vadd.f32 %v846, %v870
      %v887 = vlaneseq
      %v888 = vshrl.u32 %v887, 7
      %v889 = vsub.s32 4, %v888
      %v890 = vrot.slane %v396, %v889
      %v891 = vlaneseq
      %v892 = vshrl.u32 %v891, 7
      %v893 = vsub.s32 4, %v892
      %v894 = vrot.slane %v397, %v893
      %v895 = vmul.f32 %v425, %v890
      %v896 = vmul.f32 %v426, %v894
      %v897 = vmul.f32 %v427, %v890
      %v898 = vmul.f32 %v428, %v894
      %v899 = vmul.f32 %v429, %v890
      %v900 = vmul.f32 %v430, %v894
      %v901 = vmul.f32 %v431, %v890
      %v902 = vmul.f32 %v432, %v894
      %v903 = vmul.f32 %v433, %v890
      %v904 = vmul.f32 %v434, %v894
      %v905 = vmul.f32 %v435, %v890
      %v906 = vmul.f32 %v436, %v894
      %v907 = vmul.f32 %v437, %v890
      %v908 = vmul.f32 %v438, %v894
      %v909 = vmul.f32 %v439, %v890
      %v910 = vmul.f32 %v440, %v894
      %v911 = vmul.f32 %v441, %v890
      %v912 = vmul.f32 %v442, %v894
      %v913 = vmul.f32 %v443, %v890
      %v914 = vmul.f32 %v444, %v894
      %v915 = vmul.f32 %v445, %v890
      %v916 = vmul.f32 %v446, %v894
      %v917 = vmul.f32 %v447, %v890
      %v918 = vmul.f32 %v448, %v894
      %v919 = vmul.f32 %v449, %v890
      %v920 = vmul.f32 %v450, %v894
      %v921 = vmul.f32 %v451, %v890
      %v922 = vmul.f32 %v452, %v894
      %v923 = vmul.f32 %v453, %v890
      %v924 = vmul.f32 %v454, %v894
      %v925 = vmul.f32 %v455, %v890
      %v926 = vmul.f32 %v456, %v894
      %v959 = vrot.slane %v895, 1
      %v960 = vrot.slane %v897, 1
      %v961 = vsel %vm613, %v959, %v960
      %v962 = vrot.slane %v896, 1
      %v963 = vrot.slane %v898, 1
      %v964 = vsel %vm613, %v962, %v963
      %v965 = vrot.slane %v899, 1
      %v966 = vrot.slane %v901, 1
      %v967 = vsel %vm613, %v965, %v966
      %v968 = vrot.slane %v900, 1
      %v969 = vrot.slane %v902, 1
      %v970 = vsel %vm613, %v968, %v969
      %v971 = vrot.slane %v903, 1
      %v972 = vrot.slane %v905, 1
      %v973 = vsel %vm613, %v971, %v972
      %v974 = vrot.slane %v904, 1
      %v975 = vrot.slane %v906, 1
      %v976 = vsel %vm613, %v974, %v975
      %v977 = vrot.slane %v907, 1
      %v978 = vrot.slane %v909, 1
      %v979 = vsel %vm613, %v977, %v978
      %v980 = vrot.slane %v908, 1
      %v981 = vrot.slane %v910, 1
      %v982 = vsel %vm613, %v980, %v981
      %v983 = vrot.slane %v911, 1
      %v984 = vrot.slane %v913, 1
      %v985 = vsel %vm613, %v983, %v984
      %v986 = vrot.slane %v912, 1
      %v987 = vrot.slane %v914, 1
      %v988 = vsel %vm613, %v986, %v987
      %v989 = vrot.slane %v915, 1
      %v990 = vrot.slane %v917, 1
      %v991 = vsel %vm613, %v989, %v990
      %v992 = vrot.slane %v916, 1
      %v993 = vrot.slane %v918, 1
      %v994 = vsel %vm613, %v992, %v993
      %v995 = vrot.slane %v919, 1
      %v996 = vrot.slane %v921, 1
      %v997 = vsel %vm613, %v995, %v996
      %v998 = vrot.slane %v920, 1
      %v999 = vrot.slane %v922, 1
      %v1000 = vsel %vm613, %v998, %v999
      %v1001 = vrot.slane %v923, 1
      %v1002 = vrot.slane %v925, 1
      %v1003 = vsel %vm613, %v1001, %v1002
      %v1004 = vrot.slane %v924, 1
      %v1005 = vrot.slane %v926, 1
      %v1006 = vsel %vm613, %v1004, %v1005
      %v1023 = vadd.f32 %v871, %v961
      %v1024 = vadd.f32 %v872, %v964
      %v1025 = vadd.f32 %v873, %v967
      %v1026 = vadd.f32 %v874, %v970
      %v1027 = vadd.f32 %v875, %v973
      %v1028 = vadd.f32 %v876, %v976
      %v1029 = vadd.f32 %v877, %v979
      %v1030 = vadd.f32 %v878, %v982
      %v1031 = vadd.f32 %v879, %v985
      %v1032 = vadd.f32 %v880, %v988
      %v1033 = vadd.f32 %v881, %v991
      %v1034 = vadd.f32 %v882, %v994
      %v1035 = vadd.f32 %v883, %v997
      %v1036 = vadd.f32 %v884, %v1000
      %v1037 = vadd.f32 %v885, %v1003
      %v1038 = vadd.f32 %v886, %v1006
      %v1039 = vlaneseq
      %v1040 = vshrl.u32 %v1039, 7
      %v1041 = vsub.s32 5, %v1040
      %v1042 = vrot.slane %v396, %v1041
      %v1043 = vlaneseq
      %v1044 = vshrl.u32 %v1043, 7
      %v1045 = vsub.s32 5, %v1044
      %v1046 = vrot.slane %v397, %v1045
      %v1047 = vmul.f32 %v465, %v1042
      %v1048 = vmul.f32 %v466, %v1046
      %v1049 = vmul.f32 %v467, %v1042
      %v1050 = vmul.f32 %v468, %v1046
      %v1051 = vmul.f32 %v469, %v1042
      %v1052 = vmul.f32 %v470, %v1046
      %v1053 = vmul.f32 %v471, %v1042
      %v1054 = vmul.f32 %v472, %v1046
      %v1055 = vmul.f32 %v473, %v1042
      %v1056 = vmul.f32 %v474, %v1046
      %v1057 = vmul.f32 %v475, %v1042
      %v1058 = vmul.f32 %v476, %v1046
      %v1059 = vmul.f32 %v477, %v1042
      %v1060 = vmul.f32 %v478, %v1046
      %v1061 = vmul.f32 %v479, %v1042
      %v1062 = vmul.f32 %v480, %v1046
      %v1063 = vmul.f32 %v481, %v1042
      %v1064 = vmul.f32 %v482, %v1046
      %v1065 = vmul.f32 %v483, %v1042
      %v1066 = vmul.f32 %v484, %v1046
      %v1067 = vmul.f32 %v485, %v1042
      %v1068 = vmul.f32 %v486, %v1046
      %v1069 = vmul.f32 %v487, %v1042
      %v1070 = vmul.f32 %v488, %v1046
      %v1071 = vmul.f32 %v489, %v1042
      %v1072 = vmul.f32 %v490, %v1046
      %v1073 = vmul.f32 %v491, %v1042
      %v1074 = vmul.f32 %v492, %v1046
      %v1075 = vmul.f32 %v493, %v1042
      %v1076 = vmul.f32 %v494, %v1046
      %v1077 = vmul.f32 %v495, %v1042
      %v1078 = vmul.f32 %v496, %v1046
      %v1111 = vrot.slane %v1047, 2
      %v1112 = vrot.slane %v1049, 2
      %v1113 = vsel %vm766, %v1111, %v1112
      %v1114 = vrot.slane %v1048, 2
      %v1115 = vrot.slane %v1050, 2
      %v1116 = vsel %vm766, %v1114, %v1115
      %v1117 = vrot.slane %v1051, 2
      %v1118 = vrot.slane %v1053, 2
      %v1119 = vsel %vm766, %v1117, %v1118
      %v1120 = vrot.slane %v1052, 2
      %v1121 = vrot.slane %v1054, 2
      %v1122 = vsel %vm766, %v1120, %v1121
      %v1123 = vrot.slane %v1055, 2
      %v1124 = vrot.slane %v1057, 2
      %v1125 = vsel %vm766, %v1123, %v1124
      %v1126 = vrot.slane %v1056, 2
      %v1127 = vrot.slane %v1058, 2
      %v1128 = vsel %vm766, %v1126, %v1127
      %v1129 = vrot.slane %v1059, 2
      %v1130 = vrot.slane %v1061, 2
      %v1131 = vsel %vm766, %v1129, %v1130
      %v1132 = vrot.slane %v1060, 2
      %v1133 = vrot.slane %v1062, 2
      %v1134 = vsel %vm766, %v1132, %v1133
      %v1135 = vrot.slane %v1063, 2
      %v1136 = vrot.slane %v1065, 2
      %v1137 = vsel %vm766, %v1135, %v1136
      %v1138 = vrot.slane %v1064, 2
      %v1139 = vrot.slane %v1066, 2
      %v1140 = vsel %vm766, %v1138, %v1139
      %v1141 = vrot.slane %v1067, 2
      %v1142 = vrot.slane %v1069, 2
      %v1143 = vsel %vm766, %v1141, %v1142
      %v1144 = vrot.slane %v1068, 2
      %v1145 = vrot.slane %v1070, 2
      %v1146 = vsel %vm766, %v1144, %v1145
      %v1147 = vrot.slane %v1071, 2
      %v1148 = vrot.slane %v1073, 2
      %v1149 = vsel %vm766, %v1147, %v1148
      %v1150 = vrot.slane %v1072, 2
      %v1151 = vrot.slane %v1074, 2
      %v1152 = vsel %vm766, %v1150, %v1151
      %v1153 = vrot.slane %v1075, 2
      %v1154 = vrot.slane %v1077, 2
      %v1155 = vsel %vm766, %v1153, %v1154
      %v1156 = vrot.slane %v1076, 2
      %v1157 = vrot.slane %v1078, 2
      %v1158 = vsel %vm766, %v1156, %v1157
      %v1175 = vadd.f32 %v1023, %v1113
      %v1176 = vadd.f32 %v1024, %v1116
      %v1177 = vadd.f32 %v1025, %v1119
      %v1178 = vadd.f32 %v1026, %v1122
      %v1179 = vadd.f32 %v1027, %v1125
      %v1180 = vadd.f32 %v1028, %v1128
      %v1181 = vadd.f32 %v1029, %v1131
      %v1182 = vadd.f32 %v1030, %v1134
      %v1183 = vadd.f32 %v1031, %v1137
      %v1184 = vadd.f32 %v1032, %v1140
      %v1185 = vadd.f32 %v1033, %v1143
      %v1186 = vadd.f32 %v1034, %v1146
      %v1187 = vadd.f32 %v1035, %v1149
      %v1188 = vadd.f32 %v1036, %v1152
      %v1189 = vadd.f32 %v1037, %v1155
      %v1190 = vadd.f32 %v1038, %v1158
      %v1191 = vlaneseq
      %v1192 = vshrl.u32 %v1191, 7
      %v1193 = vsub.s32 6, %v1192
      %v1194 = vrot.slane %v396, %v1193
      %v1195 = vlaneseq
      %v1196 = vshrl.u32 %v1195, 7
      %v1197 = vsub.s32 6, %v1196
      %v1198 = vrot.slane %v397, %v1197
      %v1199 = vmul.f32 %v405, %v1194
      %v1200 = vmul.f32 %v406, %v1198
      %v1201 = vmul.f32 %v407, %v1194
      %v1202 = vmul.f32 %v408, %v1198
      %v1203 = vmul.f32 %v409, %v1194
      %v1204 = vmul.f32 %v410, %v1198
      %v1205 = vmul.f32 %v411, %v1194
      %v1206 = vmul.f32 %v412, %v1198
      %v1207 = vmul.f32 %v413, %v1194
      %v1208 = vmul.f32 %v414, %v1198
      %v1209 = vmul.f32 %v415, %v1194
      %v1210 = vmul.f32 %v416, %v1198
      %v1211 = vmul.f32 %v417, %v1194
      %v1212 = vmul.f32 %v418, %v1198
      %v1213 = vmul.f32 %v419, %v1194
      %v1214 = vmul.f32 %v420, %v1198
      %v1215 = vadd.f32 %v1175, %v1199
      %v1216 = vadd.f32 %v1176, %v1200
      %v1217 = vadd.f32 %v1177, %v1201
      %v1218 = vadd.f32 %v1178, %v1202
      %v1219 = vadd.f32 %v1179, %v1203
      %v1220 = vadd.f32 %v1180, %v1204
      %v1221 = vadd.f32 %v1181, %v1205
      %v1222 = vadd.f32 %v1182, %v1206
      %v1223 = vadd.f32 %v1183, %v1207
      %v1224 = vadd.f32 %v1184, %v1208
      %v1225 = vadd.f32 %v1185, %v1209
      %v1226 = vadd.f32 %v1186, %v1210
      %v1227 = vadd.f32 %v1187, %v1211
      %v1228 = vadd.f32 %v1188, %v1212
      %v1229 = vadd.f32 %v1189, %v1213
      %v1230 = vadd.f32 %v1190, %v1214
      %v1231 = vlaneseq
      %v1232 = vshrl.u32 %v1231, 7
      %v1233 = vsub.s32 7, %v1232
      %v1234 = vrot.slane %v396, %v1233
      %v1235 = vlaneseq
      %v1236 = vshrl.u32 %v1235, 7
      %v1237 = vsub.s32 7, %v1236
      %v1238 = vrot.slane %v397, %v1237
      %v1239 = vmul.f32 %v429, %v1234
      %v1240 = vmul.f32 %v430, %v1238
      %v1241 = vmul.f32 %v431, %v1234
      %v1242 = vmul.f32 %v432, %v1238
      %v1243 = vmul.f32 %v433, %v1234
      %v1244 = vmul.f32 %v434, %v1238
      %v1245 = vmul.f32 %v435, %v1234
      %v1246 = vmul.f32 %v436, %v1238
      %v1247 = vmul.f32 %v437, %v1234
      %v1248 = vmul.f32 %v438, %v1238
      %v1249 = vmul.f32 %v439, %v1234
      %v1250 = vmul.f32 %v440, %v1238
      %v1251 = vmul.f32 %v441, %v1234
      %v1252 = vmul.f32 %v442, %v1238
      %v1253 = vmul.f32 %v443, %v1234
      %v1254 = vmul.f32 %v444, %v1238
      %v1255 = vmul.f32 %v445, %v1234
      %v1256 = vmul.f32 %v446, %v1238
      %v1257 = vmul.f32 %v447, %v1234
      %v1258 = vmul.f32 %v448, %v1238
      %v1259 = vmul.f32 %v449, %v1234
      %v1260 = vmul.f32 %v450, %v1238
      %v1261 = vmul.f32 %v451, %v1234
      %v1262 = vmul.f32 %v452, %v1238
      %v1263 = vmul.f32 %v453, %v1234
      %v1264 = vmul.f32 %v454, %v1238
      %v1265 = vmul.f32 %v455, %v1234
      %v1266 = vmul.f32 %v456, %v1238
      %v1267 = vmul.f32 %v457, %v1234
      %v1268 = vmul.f32 %v458, %v1238
      %v1269 = vmul.f32 %v459, %v1234
      %v1270 = vmul.f32 %v460, %v1238
      %v1303 = vrot.slane %v1239, 1
      %v1304 = vrot.slane %v1241, 1
      %v1305 = vsel %vm613, %v1303, %v1304
      %v1306 = vrot.slane %v1240, 1
      %v1307 = vrot.slane %v1242, 1
      %v1308 = vsel %vm613, %v1306, %v1307
      %v1309 = vrot.slane %v1243, 1
      %v1310 = vrot.slane %v1245, 1
      %v1311 = vsel %vm613, %v1309, %v1310
      %v1312 = vrot.slane %v1244, 1
      %v1313 = vrot.slane %v1246, 1
      %v1314 = vsel %vm613, %v1312, %v1313
      %v1315 = vrot.slane %v1247, 1
      %v1316 = vrot.slane %v1249, 1
      %v1317 = vsel %vm613, %v1315, %v1316
      %v1318 = vrot.slane %v1248, 1
      %v1319 = vrot.slane %v1250, 1
      %v1320 = vsel %vm613, %v1318, %v1319
      %v1321 = vrot.slane %v1251, 1
      %v1322 = vrot.slane %v1253, 1
      %v1323 = vsel %vm613, %v1321, %v1322
      %v1324 = vrot.slane %v1252, 1
      %v1325 = vrot.slane %v1254, 1
      %v1326 = vsel %vm613, %v1324, %v1325
      %v1327 = vrot.slane %v1255, 1
      %v1328 = vrot.slane %v1257, 1
      %v1329 = vsel %vm613, %v1327, %v1328
      %v1330 = vrot.slane %v1256, 1
      %v1331 = vrot.slane %v1258, 1
      %v1332 = vsel %vm613, %v1330, %v1331
      %v1333 = vrot.slane %v1259, 1
      %v1334 = vrot.slane %v1261, 1
      %v1335 = vsel %vm613, %v1333, %v1334
      %v1336 = vrot.slane %v1260, 1
      %v1337 = vrot.slane %v1262, 1
      %v1338 = vsel %vm613, %v1336, %v1337
      %v1339 = vrot.slane %v1263, 1
      %v1340 = vrot.slane %v1265, 1
      %v1341 = vsel %vm613, %v1339, %v1340
      %v1342 = vrot.slane %v1264, 1
      %v1343 = vrot.slane %v1266, 1
      %v1344 = vsel %vm613, %v1342, %v1343
      %v1345 = vrot.slane %v1267, 1
      %v1346 = vrot.slane %v1269, 1
      %v1347 = vsel %vm613, %v1345, %v1346
      %v1348 = vrot.slane %v1268, 1
      %v1349 = vrot.slane %v1270, 1
      %v1350 = vsel %vm613, %v1348, %v1349
      %v1367 = vadd.f32 %v1215, %v1305
      %v1368 = vadd.f32 %v1216, %v1308
      %v1369 = vadd.f32 %v1217, %v1311
      %v1370 = vadd.f32 %v1218, %v1314
      %v1371 = vadd.f32 %v1219, %v1317
      %v1372 = vadd.f32 %v1220, %v1320
      %v1373 = vadd.f32 %v1221, %v1323
      %v1374 = vadd.f32 %v1222, %v1326
      %v1375 = vadd.f32 %v1223, %v1329
      %v1376 = vadd.f32 %v1224, %v1332
      %v1377 = vadd.f32 %v1225, %v1335
      %v1378 = vadd.f32 %v1226, %v1338
      %v1379 = vadd.f32 %v1227, %v1341
      %v1380 = vadd.f32 %v1228, %v1344
      %v1381 = vadd.f32 %v1229, %v1347
      %v1382 = vadd.f32 %v1230, %v1350
      %v1383 = vlaneseq
      %v1384 = vshrl.u32 %v1383, 7
      %v1385 = vsub.s32 0, %v1384
      %v1386 = vrot.slane %v398, %v1385
      %v1387 = vlaneseq
      %v1388 = vshrl.u32 %v1387, 7
      %v1389 = vsub.s32 0, %v1388
      %v1390 = vrot.slane %v399, %v1389
      %v1391 = vmul.f32 %v469, %v1386
      %v1392 = vmul.f32 %v470, %v1390
      %v1393 = vmul.f32 %v471, %v1386
      %v1394 = vmul.f32 %v472, %v1390
      %v1395 = vmul.f32 %v473, %v1386
      %v1396 = vmul.f32 %v474, %v1390
      %v1397 = vmul.f32 %v475, %v1386
      %v1398 = vmul.f32 %v476, %v1390
      %v1399 = vmul.f32 %v477, %v1386
      %v1400 = vmul.f32 %v478, %v1390
      %v1401 = vmul.f32 %v479, %v1386
      %v1402 = vmul.f32 %v480, %v1390
      %v1403 = vmul.f32 %v481, %v1386
      %v1404 = vmul.f32 %v482, %v1390
      %v1405 = vmul.f32 %v483, %v1386
      %v1406 = vmul.f32 %v484, %v1390
      %v1407 = vmul.f32 %v485, %v1386
      %v1408 = vmul.f32 %v486, %v1390
      %v1409 = vmul.f32 %v487, %v1386
      %v1410 = vmul.f32 %v488, %v1390
      %v1411 = vmul.f32 %v489, %v1386
      %v1412 = vmul.f32 %v490, %v1390
      %v1413 = vmul.f32 %v491, %v1386
      %v1414 = vmul.f32 %v492, %v1390
      %v1415 = vmul.f32 %v493, %v1386
      %v1416 = vmul.f32 %v494, %v1390
      %v1417 = vmul.f32 %v495, %v1386
      %v1418 = vmul.f32 %v496, %v1390
      %v1419 = vmul.f32 %v497, %v1386
      %v1420 = vmul.f32 %v498, %v1390
      %v1421 = vmul.f32 %v499, %v1386
      %v1422 = vmul.f32 %v500, %v1390
      %v1455 = vrot.slane %v1391, 2
      %v1456 = vrot.slane %v1393, 2
      %v1457 = vsel %vm766, %v1455, %v1456
      %v1458 = vrot.slane %v1392, 2
      %v1459 = vrot.slane %v1394, 2
      %v1460 = vsel %vm766, %v1458, %v1459
      %v1461 = vrot.slane %v1395, 2
      %v1462 = vrot.slane %v1397, 2
      %v1463 = vsel %vm766, %v1461, %v1462
      %v1464 = vrot.slane %v1396, 2
      %v1465 = vrot.slane %v1398, 2
      %v1466 = vsel %vm766, %v1464, %v1465
      %v1467 = vrot.slane %v1399, 2
      %v1468 = vrot.slane %v1401, 2
      %v1469 = vsel %vm766, %v1467, %v1468
      %v1470 = vrot.slane %v1400, 2
      %v1471 = vrot.slane %v1402, 2
      %v1472 = vsel %vm766, %v1470, %v1471
      %v1473 = vrot.slane %v1403, 2
      %v1474 = vrot.slane %v1405, 2
      %v1475 = vsel %vm766, %v1473, %v1474
      %v1476 = vrot.slane %v1404, 2
      %v1477 = vrot.slane %v1406, 2
      %v1478 = vsel %vm766, %v1476, %v1477
      %v1479 = vrot.slane %v1407, 2
      %v1480 = vrot.slane %v1409, 2
      %v1481 = vsel %vm766, %v1479, %v1480
      %v1482 = vrot.slane %v1408, 2
      %v1483 = vrot.slane %v1410, 2
      %v1484 = vsel %vm766, %v1482, %v1483
      %v1485 = vrot.slane %v1411, 2
      %v1486 = vrot.slane %v1413, 2
      %v1487 = vsel %vm766, %v1485, %v1486
      %v1488 = vrot.slane %v1412, 2
      %v1489 = vrot.slane %v1414, 2
      %v1490 = vsel %vm766, %v1488, %v1489
      %v1491 = vrot.slane %v1415, 2
      %v1492 = vrot.slane %v1417, 2
      %v1493 = vsel %vm766, %v1491, %v1492
      %v1494 = vrot.slane %v1416, 2
      %v1495 = vrot.slane %v1418, 2
      %v1496 = vsel %vm766, %v1494, %v1495
      %v1497 = vrot.slane %v1419, 2
      %v1498 = vrot.slane %v1421, 2
      %v1499 = vsel %vm766, %v1497, %v1498
      %v1500 = vrot.slane %v1420, 2
      %v1501 = vrot.slane %v1422, 2
      %v1502 = vsel %vm766, %v1500, %v1501
      %v1519 = vadd.f32 %v1367, %v1457
      %v1520 = vadd.f32 %v1368, %v1460
      %v1521 = vadd.f32 %v1369, %v1463
      %v1522 = vadd.f32 %v1370, %v1466
      %v1523 = vadd.f32 %v1371, %v1469
      %v1524 = vadd.f32 %v1372, %v1472
      %v1525 = vadd.f32 %v1373, %v1475
      %v1526 = vadd.f32 %v1374, %v1478
      %v1527 = vadd.f32 %v1375, %v1481
      %v1528 = vadd.f32 %v1376, %v1484
      %v1529 = vadd.f32 %v1377, %v1487
      %v1530 = vadd.f32 %v1378, %v1490
      %v1531 = vadd.f32 %v1379, %v1493
      %v1532 = vadd.f32 %v1380, %v1496
      %v1533 = vadd.f32 %v1381, %v1499
      %v1534 = vadd.f32 %v1382, %v1502
      %v1536 = vlaneseq
      %v1537 = vshrl.u32 %v1536, 7
      %v1538 = vsub.s32 0, %v1537
      %v1539 = vrot.slane %v400, %v1538
      %v1540 = vlaneseq
      %v1541 = vshrl.u32 %v1540, 7
      %v1542 = vsub.s32 1, %v1541
      %v1543 = vrot.slane %v400, %v1542
      %v1546 = vadd.f32 %v1519, %v1539
      %v1547 = vadd.f32 %v1520, %v1543
      %v1548 = vadd.f32 %v1521, %v1539
      %v1549 = vadd.f32 %v1522, %v1543
      %v1550 = vadd.f32 %v1523, %v1539
      %v1551 = vadd.f32 %v1524, %v1543
      %v1552 = vadd.f32 %v1525, %v1539
      %v1553 = vadd.f32 %v1526, %v1543
      %v1554 = vadd.f32 %v1527, %v1539
      %v1555 = vadd.f32 %v1528, %v1543
      %v1556 = vadd.f32 %v1529, %v1539
      %v1557 = vadd.f32 %v1530, %v1543
      %v1558 = vadd.f32 %v1531, %v1539
      %v1559 = vadd.f32 %v1532, %v1543
      %v1560 = vadd.f32 %v1533, %v1539
      %v1561 = vadd.f32 %v1534, %v1543
      %v1562 = vmul.f32 %v1546, 0.5
      %v1563 = vmul.f32 %v1547, 0.5
      %v1564 = vmul.f32 %v1548, 0.5
      %v1565 = vmul.f32 %v1549, 0.5
      %v1566 = vmul.f32 %v1550, 0.5
      %v1567 = vmul.f32 %v1551, 0.5
      %v1568 = vmul.f32 %v1552, 0.5
      %v1569 = vmul.f32 %v1553, 0.5
      %v1570 = vmul.f32 %v1554, 0.5
      %v1571 = vmul.f32 %v1555, 0.5
      %v1572 = vmul.f32 %v1556, 0.5
      %v1573 = vmul.f32 %v1557, 0.5
      %v1574 = vmul.f32 %v1558, 0.5
      %v1575 = vmul.f32 %v1559, 0.5
      %v1576 = vmul.f32 %v1560, 0.5
      %v1577 = vmul.f32 %v1561, 0.5
      %v1578 = vmul.f32 %v1546, 0.70710677
      %v1579 = vmul.f32 %v1547, 0.70710677
      %v1580 = vmul.f32 %v1548, 0.70710677
      %v1581 = vmul.f32 %v1549, 0.70710677
      %v1582 = vmul.f32 %v1550, 0.70710677
      %v1583 = vmul.f32 %v1551, 0.70710677
      %v1584 = vmul.f32 %v1552, 0.70710677
      %v1585 = vmul.f32 %v1553, 0.70710677
      %v1586 = vmul.f32 %v1554, 0.70710677
      %v1587 = vmul.f32 %v1555, 0.70710677
      %v1588 = vmul.f32 %v1556, 0.70710677
      %v1589 = vmul.f32 %v1557, 0.70710677
      %v1590 = vmul.f32 %v1558, 0.70710677
      %v1591 = vmul.f32 %v1559, 0.70710677
      %v1592 = vmul.f32 %v1560, 0.70710677
      %v1593 = vmul.f32 %v1561, 0.70710677
      %v1594 = verf.f32.pop %v1578
      %v1595 = verf.f32.pop %v1579
      %v1596 = verf.f32.pop %v1580
      %v1597 = verf.f32.pop %v1581
      %v1598 = verf.f32.pop %v1582
      %v1599 = verf.f32.pop %v1583
      %v1600 = verf.f32.pop %v1584
      %v1601 = verf.f32.pop %v1585
      %v1602 = verf.f32.pop %v1586
      %v1603 = verf.f32.pop %v1587
      %v1604 = verf.f32.pop %v1588
      %v1605 = verf.f32.pop %v1589
      %v1606 = verf.f32.pop %v1590
      %v1607 = verf.f32.pop %v1591
      %v1608 = verf.f32.pop %v1592
      %v1609 = verf.f32.pop %v1593
      %v1610 = vadd.f32 %v1594, 1.0
      %v1611 = vadd.f32 %v1595, 1.0
      %v1612 = vadd.f32 %v1596, 1.0
      %v1613 = vadd.f32 %v1597, 1.0
      %v1614 = vadd.f32 %v1598, 1.0
      %v1615 = vadd.f32 %v1599, 1.0
      %v1616 = vadd.f32 %v1600, 1.0
      %v1617 = vadd.f32 %v1601, 1.0
      %v1618 = vadd.f32 %v1602, 1.0
      %v1619 = vadd.f32 %v1603, 1.0
      %v1620 = vadd.f32 %v1604, 1.0
      %v1621 = vadd.f32 %v1605, 1.0
      %v1622 = vadd.f32 %v1606, 1.0
      %v1623 = vadd.f32 %v1607, 1.0
      %v1624 = vadd.f32 %v1608, 1.0
      %v1625 = vadd.f32 %v1609, 1.0
      %v1626 = vmul.f32 %v1562, %v1610
      %v1627 = vmul.f32 %v1563, %v1611
      %v1628 = vmul.f32 %v1564, %v1612
      %v1629 = vmul.f32 %v1565, %v1613
      %v1630 = vmul.f32 %v1566, %v1614
      %v1631 = vmul.f32 %v1567, %v1615
      %v1632 = vmul.f32 %v1568, %v1616
      %v1633 = vmul.f32 %v1569, %v1617
      %v1634 = vmul.f32 %v1570, %v1618
      %v1635 = vmul.f32 %v1571, %v1619
      %v1636 = vmul.f32 %v1572, %v1620
      %v1637 = vmul.f32 %v1573, %v1621
      %v1638 = vmul.f32 %v1574, %v1622
      %v1639 = vmul.f32 %v1575, %v1623
      %v1640 = vmul.f32 %v1576, %v1624
      %v1641 = vmul.f32 %v1577, %v1625
      %v1642 = vpack.c.bf16 %v1626, %v1626
      %v1643 = vpack.c.bf16 %v1627, %v1627
      %v1644 = vpack.c.bf16 %v1628, %v1628
      %v1645 = vpack.c.bf16 %v1629, %v1629
      %v1646 = vpack.c.bf16 %v1630, %v1630
      %v1647 = vpack.c.bf16 %v1631, %v1631
      %v1648 = vpack.c.bf16 %v1632, %v1632
      %v1649 = vpack.c.bf16 %v1633, %v1633
      %v1650 = vpack.c.bf16 %v1634, %v1634
      %v1651 = vpack.c.bf16 %v1635, %v1635
      %v1652 = vpack.c.bf16 %v1636, %v1636
      %v1653 = vpack.c.bf16 %v1637, %v1637
      %v1654 = vpack.c.bf16 %v1638, %v1638
      %v1655 = vpack.c.bf16 %v1639, %v1639
      %v1656 = vpack.c.bf16 %v1640, %v1640
      %v1657 = vpack.c.bf16 %v1641, %v1641
      %v1674 = vunpack.c.l.b16 %v1642
      %v1675 = vunpack.c.l.b16 %v1643
      %v1676 = vunpack.c.l.b16 %v1644
      %v1677 = vunpack.c.l.b16 %v1645
      %v1678 = vunpack.c.l.b16 %v1646
      %v1679 = vunpack.c.l.b16 %v1647
      %v1680 = vunpack.c.l.b16 %v1648
      %v1681 = vunpack.c.l.b16 %v1649
      %v1682 = vunpack.c.l.b16 %v1650
      %v1683 = vunpack.c.l.b16 %v1651
      %v1684 = vunpack.c.l.b16 %v1652
      %v1685 = vunpack.c.l.b16 %v1653
      %v1686 = vunpack.c.l.b16 %v1654
      %v1687 = vunpack.c.l.b16 %v1655
      %v1688 = vunpack.c.l.b16 %v1656
      %v1689 = vunpack.c.l.b16 %v1657
      %v1690 = vpack.c.b16 %v1675, %v1674
      %v1691 = vpack.c.b16 %v1677, %v1676
      %v1692 = vpack.c.b16 %v1679, %v1678
      %v1693 = vpack.c.b16 %v1681, %v1680
      %v1694 = vpack.c.b16 %v1683, %v1682
      %v1695 = vpack.c.b16 %v1685, %v1684
      %v1696 = vpack.c.b16 %v1687, %v1686
      %v1697 = vpack.c.b16 %v1689, %v1688
      %1706 = vst [vmem:[%s249] sm:$0xff] %v1690
      %1707 = vst [vmem:[%s249 + $0x8] sm:$0xff] %v1691
      %1708 = vst [vmem:[%s249 + $0x10] sm:$0xff] %v1692
      %1709 = vst [vmem:[%s249 + $0x18] sm:$0xff] %v1693
      %1710 = vst [vmem:[%s249 + $0x20] sm:$0xff] %v1694
      %1711 = vst [vmem:[%s249 + $0x28] sm:$0xff] %v1695
      %1712 = vst [vmem:[%s249 + $0x30] sm:$0xff] %v1696
      %1713 = vst [vmem:[%s249 + $0x38] sm:$0xff] %v1697
      %s1714 = smul.u32 2, %s19
      %p1715 = scmp.lt.s32.totalorder %s18, 1
      %s1716 = scalar_select %p1715, %s18, 1
      %p1717 = scmp.lt.s32.totalorder %s1714, 1
      %s1718 = scalar_select %p1717, %s1714, 1
      %s1719 = smul.addr %s1716, 16
      %s1720 = sadd.s32 %s1718, %s1719
      %s1721 = smul.addr %s1720, 4
      %s1722 = scalar_lea.vmem %s3, %s1721
      // Predicated region
      $region33: #{_lambda_.4} parent=31 // pred_check
        %p1723 = pneg %p126
      $region34: #{_lambda_.4} parent=31 // pred_check_branch
        %1725 = sbr.rel (%p1723) target = $region36
      $region35: #{_lambda_.4} parent=31 // pred_region
        %s1726 = smul.u32 2, %s19
      $region36: #{_lambda_.4} parent=31 // pred_fallthru
        _
    $region32: #{_lambda_.4} parent=5 // pred_fallthru
      _
    %p1727 = scmp.le.s32.totalorder 2, %s9
    // Predicated region
    $region37: #{_lambda_.4} parent=5 // pred_check
      %p1728 = pneg %p1727
    $region38: #{_lambda_.4} parent=5 // pred_check_branch
      %1730 = sbr.rel (%p1728) target = $region40
    $region39: #{_lambda_.4} parent=5 // pred_region
      %s1731 = ssub.s32 %s9, 2
      // Predicated region
      $region41: #{_lambda_.4} parent=39 // pred_check
        %p1732 = pneg %p132
      $region42: #{_lambda_.4} parent=39 // pred_check_branch
        %1734 = sbr.rel (%p1732) target = $region44
      $region43: #{_lambda_.4} parent=39 // pred_region
        %s1735 = smul.u32 2, %s21
        %p1736 = scmp.lt.s32.totalorder %s20, 1
        %s1737 = scalar_select %p1736, %s20, 1
        %p1738 = scmp.lt.s32.totalorder %s1735, 1
        %s1739 = scalar_select %p1738, %s1735, 1
        %s1740 = smul.addr %s1737, 16
        %s1741 = sadd.s32 %s1739, %s1740
        %s1742 = smul.addr %s1741, 4
        %s1743 = scalar_lea.vmem %s3, %s1742
      $region44: #{_lambda_.4} parent=39 // pred_fallthru
        _
    $region40: #{_lambda_.4} parent=5 // pred_fallthru
      _
  $region6: #{_lambda_.4} parent=0 // loop_footer
    %s13 = sadd.s32 1, %s9
  $region7: #{_lambda_.4} parent=0 // loop_footer_branch
    %8 = sbr.rel target = $region3
  $region8: #{_lambda_.4} parent=0 // loop_exit
    _

</llo_original>
